<compile_context>
chip_gen: v7x
topology: tpu7x:2x2x1
jax: 0.10.0
libtpu: 0.0.40
codegen_flags: <defaults>
</compile_context>

<pallas_src>
import functools

import jax
import jax.numpy as jnp
from jax.experimental import pallas as pl
from jax.experimental.pallas import tpu as pltpu

EPS = 1e-6


def _rmsnorm(x):
    # RMSNorm(x) = x * rsqrt(mean(x^2, -1) + eps), no learnable scale (f32 math).
    return x * jax.lax.rsqrt(jnp.mean(x * x, axis=-1, keepdims=True) + EPS)


def _tpu_kind():
    try:
        return jax.devices()[0].device_kind.lower()
    except Exception:
        return ""


def _has_bf16_vpu(kind):
    # v6e / v7x have bf16 VPU + EUP; v5e (and older) do not -> keep f32 there.
    return ("v6" in kind) or ("v7" in kind)


def _is_two_tensorcore(kind):
    # v7x has 2 TensorCores per chip; v5e/v6e have 1.
    return "v7" in kind


def _pick_block_b(B, mlp_dim, two_cores):
    b16 = -(-B // 16) * 16
    # Cap rows so the live (block_b, mlp_dim) scores tile stays small enough to
    # avoid vreg spills (spill traffic lands on the vld/vst slots; v5e has 1 vst).
    cap = 256 if mlp_dim <= 1024 else 128
    if two_cores:
        # Keep >= 2 grid steps so the "parallel" axis shards across both v7x TCs.
        half = max(16, -(-(b16 // 2) // 16) * 16) if b16 >= 32 else 16
        block = min(cap, half)
    else:
        # Single TensorCore: extra grid steps are pure ~0.35us/step overhead.
        block = min(cap, b16)
    return max(16, (block // 16) * 16)


def adaln_mlp_kernel(x_ref, c_ref, wmod_ref, wk_ref, wv_ref, o_ref, *,
                     fused_mod, bf16_elementwise):
    """One batch tile per grid step; all three matmuls + elementwise fused.

    x_ref/c_ref/o_ref: (tb, dim) f32
    wmod_ref: (dim, 3*dim) bf16 if fused_mod else (3, dim, dim) bf16
    wk_ref:   (dim, mlp_dim) bf16
    wv_ref:   (mlp_dim, dim) bf16
    """
    x = x_ref[...].astype(jnp.float32)
    c = c_ref[...].astype(jnp.float32)
    dim = x.shape[-1]

    # --- AdaLN modulation from the conditioning vector c (RMSNorm in f32) ----
    cn = _rmsnorm(c).astype(jnp.bfloat16)
    if fused_mod:
        # dim % 128 == 0: single (tb, dim) x (dim, 3*dim) dot -> one MXU RHS
        # push/drain; slice offsets dim / 2*dim are lane-aligned (multiples of 128).
        mod = jnp.dot(cn, wmod_ref[...], preferred_element_type=jnp.float32)
        gate = mod[:, :dim]
        shift = mod[:, dim:2 * dim]
        scale = mod[:, 2 * dim:]
    else:
        # Non-aligned dim: three lane-aligned (dim, dim) matmuls instead of
        # slicing at non-128-aligned lane offsets.
        gate = jnp.dot(cn, wmod_ref[0], preferred_element_type=jnp.float32)
        shift = jnp.dot(cn, wmod_ref[1], preferred_element_type=jnp.float32)
        scale = jnp.dot(cn, wmod_ref[2], preferred_element_type=jnp.float32)

    # --- MLP path on x --------------------------------------------------------
    xn = _rmsnorm(x)
    if bf16_elementwise:
        # v6e/v7x: bf16 VPU/EUP -> halves the largest live intermediates.
        h = (xn.astype(jnp.bfloat16) * (1 + gate.astype(jnp.bfloat16))
             + shift.astype(jnp.bfloat16))
    else:
        # v5e: no bf16 VPU/EUP -> elementwise math in f32, cast only for the MXU.
        h = (xn * (1.0 + gate) + shift).astype(jnp.bfloat16)

    s = jnp.dot(h, wk_ref[...], preferred_element_type=jnp.float32)
    if bf16_elementwise:
        s = s.astype(jnp.bfloat16)
        s = s * jax.nn.sigmoid(s)            # SiLU in bf16 (bf16 EUP path)
    else:
        s = (s * jax.nn.sigmoid(s)).astype(jnp.bfloat16)   # SiLU in f32 (v5e)

    v = jnp.dot(s, wv_ref[...], preferred_element_type=jnp.float32)

    # Residual + scale stay in f32 for skip-connection accuracy.
    o_ref[...] = (x + v * scale).astype(o_ref.dtype)


def prepare_adaln_weights(w_mod, w_k, w_v):
    """One-time weight preprocessing (hoist OUT of the per-step hot path).

    w_mod: [dim, 3*dim] (columns = gate | shift | scale), w_k: [dim, mlp_dim],
    w_v: [mlp_dim, dim]; all in [in, out] layout.
    Returns (w_mod_prepped_bf16, w_k_bf16, w_v_bf16, fused_mod_flag).
    """
    dim, three_dim = w_mod.shape
    assert three_dim == 3 * dim, "w_mod must be [dim, 3*dim]"
    fused_mod = (dim % 128 == 0)
    if fused_mod:
        w_mod_p = w_mod.astype(jnp.bfloat16)                       # (dim, 3*dim)
    else:
        w_mod_p = jnp.transpose(w_mod.reshape(dim, 3, dim),
                                (1, 0, 2)).astype(jnp.bfloat16)    # (3, dim, dim)
    return w_mod_p, w_k.astype(jnp.bfloat16), w_v.astype(jnp.bfloat16), fused_mod


def adaln_mlp_block(x, c, w_mod_p, w_k_b, w_v_b, *, fused_mod,
                    block_b=None, bf16_elementwise=None, act_buffers=2):
    """Fused AdaLNMLPBlock forward (weights already prepped via prepare_adaln_weights).

    x, c    : [B, dim] f32 activations
    w_mod_p : [dim, 3*dim] bf16 (fused_mod=True) or [3, dim, dim] bf16
    w_k_b   : [dim, mlp_dim] bf16        w_v_b : [mlp_dim, dim] bf16
    """
    B, dim = x.shape
    mlp_dim = w_k_b.shape[1]
    kind = _tpu_kind()
    if bf16_elementwise is None:
        bf16_elementwise = _has_bf16_vpu(kind)

    if block_b is None:
        block_b = _pick_block_b(B, mlp_dim, _is_two_tensorcore(kind))
    block_b = max(16, (block_b // 16) * 16)   # bf16 MXU operands: min (16,128) tile

    # Pad ragged batches up to a multiple of the tile (zero rows are harmless:
    # rsqrt(0 + eps) is finite; padded rows are sliced off below).
    padded_b = -(-B // block_b) * block_b
    if padded_b != B:
        pad = padded_b - B
        x_in = jnp.pad(x, ((0, pad), (0, 0)))
        c_in = jnp.pad(c, ((0, pad), (0, 0)))
    else:
        x_in, c_in = x, c

    # VMEM budget: single-buffered bf16 weights + pipelined f32 activation tiles
    # + intermediates + headroom; cap at 56 MiB (leaves slack on v7x's 64 MiB/TC).
    weight_bytes = (w_mod_p.size + w_k_b.size + w_v_b.size) * 2
    act_bytes = (act_buffers + 1) * 2 * block_b * dim * 4
    inter_bytes = block_b * (4 * dim + 2 * mlp_dim) * 4
    need = weight_bytes + act_bytes + inter_bytes
    if need > (56 << 20):
        # Resident weights would not fit per-TensorCore VMEM; needs an mlp_dim
        # reduction grid axis instead of fully-resident w_k/w_v.
        raise ValueError(
            f"AdaLNMLPBlock weights/intermediates need ~{need >> 20} MiB VMEM; "
            "tile mlp_dim with a reduction grid axis for shapes this large.")
    vmem_limit = int(min(max(need + (8 << 20), 32 << 20), 56 << 20))

    cost = pl.CostEstimate(
        flops=2 * padded_b * dim * (3 * dim + 2 * mlp_dim),
        # sigmoid ~ exp + reciprocal per element, plus 2 rsqrt per row
        transcendentals=padded_b * (2 * mlp_dim + 2),
        bytes_accessed=3 * padded_b * dim * 4 + weight_bytes,
    )

    resident = pl.Buffered(1)  # constant index_map -> double-buffering buys nothing
    if act_buffers == 2:
        x_spec = pl.BlockSpec((block_b, dim), lambda i: (i, 0))
        c_spec = pl.BlockSpec((block_b, dim), lambda i: (i, 0))
    else:
        # Raise to 3 only if profiling shows exposed activation DMA.
        act_pm = pl.Buffered(act_buffers)
        x_spec = pl.BlockSpec((block_b, dim), lambda i: (i, 0), pipeline_mode=act_pm)
        c_spec = pl.BlockSpec((block_b, dim), lambda i: (i, 0), pipeline_mode=act_pm)

    if fused_mod:
        wmod_spec = pl.BlockSpec((dim, 3 * dim), lambda i: (0, 0), pipeline_mode=resident)
    else:
        wmod_spec = pl.BlockSpec((3, dim, dim), lambda i: (0, 0, 0), pipeline_mode=resident)

    kernel = functools.partial(adaln_mlp_kernel, fused_mod=fused_mod,
                               bf16_elementwise=bf16_elementwise)

    out = pl.pallas_call(
        kernel,
        out_shape=jax.ShapeDtypeStruct((padded_b, dim), x.dtype),
        grid_spec=pltpu.PrefetchScalarGridSpec(
            num_scalar_prefetch=0,
            grid=(padded_b // block_b,),
            in_specs=[
                x_spec,                                                   # x tile
                c_spec,                                                   # c tile
                wmod_spec,                                                # w_mod (resident)
                pl.BlockSpec((dim, mlp_dim), lambda i: (0, 0),
                             pipeline_mode=resident),                     # w_k (resident)
                pl.BlockSpec((mlp_dim, dim), lambda i: (0, 0),
                             pipeline_mode=resident),                     # w_v (resident)
            ],
            out_specs=pl.BlockSpec((block_b, dim), lambda i: (i, 0)),     # lane-dense out
        ),
        compiler_params=pltpu.CompilerParams(
            dimension_semantics=("parallel",),
            vmem_limit_bytes=vmem_limit,
        ),
        cost_estimate=cost,
    )(x_in, c_in, w_mod_p, w_k_b, w_v_b)

    return out[:B] if padded_b != B else out


def adaln_mlp_ref(x, c, w_mod, w_k, w_v, *, bf16_elementwise):
    """Pure-JAX reference mirroring the kernel numerics exactly."""
    dim = x.shape[-1]
    x = x.astype(jnp.float32)
    c = c.astype(jnp.float32)
    cn = _rmsnorm(c).astype(jnp.bfloat16)
    mod = jnp.dot(cn, w_mod.astype(jnp.bfloat16), preferred_element_type=jnp.float32)
    gate, shift, scale = mod[:, :dim], mod[:, dim:2 * dim], mod[:, 2 * dim:]
    xn = _rmsnorm(x)
    if bf16_elementwise:
        h = (xn.astype(jnp.bfloat16) * (1 + gate.astype(jnp.bfloat16))
             + shift.astype(jnp.bfloat16))
    else:
        h = (xn * (1.0 + gate) + shift).astype(jnp.bfloat16)
    s = jnp.dot(h, w_k.astype(jnp.bfloat16), preferred_element_type=jnp.float32)
    if bf16_elementwise:
        s = s.astype(jnp.bfloat16)
        s = s * jax.nn.sigmoid(s)
    else:
        s = (s * jax.nn.sigmoid(s)).astype(jnp.bfloat16)
    v = jnp.dot(s, w_v.astype(jnp.bfloat16), preferred_element_type=jnp.float32)
    return x + v * scale


if __name__ == "__main__":
    # Small but lane/MXU-friendly shapes (dim % 128 == 0 -> fused modulation dot
    # and a lane-dense output tile).
    B, dim, mlp_dim = 256, 128, 256

    key = jax.random.PRNGKey(0)
    kx, kc, kk, kv, km = jax.random.split(key, 5)

    x = jax.random.normal(kx, (B, dim), dtype=jnp.float32)
    c = jax.random.normal(kc, (B, dim), dtype=jnp.float32)

    # Parameters in [in, out] layout (transposed vs. torch.nn.Linear).
    w_k = jax.random.normal(kk, (dim, mlp_dim), dtype=jnp.float32) / jnp.sqrt(dim)
    w_v = jax.random.normal(kv, (mlp_dim, dim), dtype=jnp.float32) / jnp.sqrt(mlp_dim)

    bf16_ew = _has_bf16_vpu(_tpu_kind())

    # 1) As-initialized module: modulation is zero_init => scale == 0 => out == x.
    w_mod_zero = jnp.zeros((dim, 3 * dim), dtype=jnp.float32)
    wm0, wkb, wvb, fused = prepare_adaln_weights(w_mod_zero, w_k, w_v)   # hoisted, one-time
    out0 = jax.block_until_ready(
        adaln_mlp_block(x, c, wm0, wkb, wvb, fused_mod=fused, bf16_elementwise=bf16_ew))
    assert jnp.allclose(out0, x, atol=1e-6), "zero-init path should be identity"

    # 2) Non-zero modulation weights exercise the full data path.
    w_mod = 0.1 * jax.random.normal(km, (dim, 3 * dim), dtype=jnp.float32)
    wm1, _, _, fused = prepare_adaln_weights(w_mod, w_k, w_v)
    out1 = jax.block_until_ready(
        adaln_mlp_block(x, c, wm1, wkb, wvb, fused_mod=fused, bf16_elementwise=bf16_ew))
    ref1 = adaln_mlp_ref(x, c, w_mod, w_k, w_v, bf16_elementwise=bf16_ew)
    err = float(jnp.max(jnp.abs(out1 - ref1)))
    assert jnp.allclose(out1, ref1, atol=2e-2, rtol=2e-2), f"max abs err = {err}"

    print("KERNEL_OK")
</pallas_src>

<mosaic_0001>
module attributes {stable_mosaic.version = 11 : i64} {
  func.func @adaln_mlp_kernel(%arg0: i32, %arg1: memref<256x128xf32, #tpu.memory_space<vmem>>, %arg2: memref<256x128xf32, #tpu.memory_space<vmem>>, %arg3: memref<128x384xbf16, #tpu.memory_space<vmem>>, %arg4: memref<128x256xbf16, #tpu.memory_space<vmem>>, %arg5: memref<256x128xbf16, #tpu.memory_space<vmem>>, %arg6: memref<256x128xf32, #tpu.memory_space<vmem>>) attributes {dimension_semantics = [#tpu.dimension_semantics<parallel>], iteration_bounds = array<i64: 1>, scalar_prefetch = 0 : i64, scratch_operands = 0 : i64, tpu.core_type = #tpu.core_type<tc>, window_params = [{transform_indices = @transform_0, window_bounds = array<i64: 256, 128>}, {transform_indices = @transform_1, window_bounds = array<i64: 256, 128>}, {pipeline_mode = #tpu.pipeline_mode<synchronous>, transform_indices = @transform_2, window_bounds = array<i64: 128, 384>}, {pipeline_mode = #tpu.pipeline_mode<synchronous>, transform_indices = @transform_3, window_bounds = array<i64: 128, 256>}, {pipeline_mode = #tpu.pipeline_mode<synchronous>, transform_indices = @transform_4, window_bounds = array<i64: 256, 128>}, {transform_indices = @transform_5, window_bounds = array<i64: 256, 128>}]} {
    %c0 = arith.constant 0 : index
    %c0_0 = arith.constant 0 : index
    %0 = vector.load %arg1[%c0, %c0_0] : memref<256x128xf32, #tpu.memory_space<vmem>>, vector<256x128xf32>
    %c0_1 = arith.constant 0 : index
    %c0_2 = arith.constant 0 : index
    %1 = vector.load %arg2[%c0_1, %c0_2] : memref<256x128xf32, #tpu.memory_space<vmem>>, vector<256x128xf32>
    %2 = arith.mulf %1, %1 : vector<256x128xf32>
    %cst = arith.constant dense<0.000000e+00> : vector<256xf32>
    %3 = vector.multi_reduction <add>, %2, %cst [1] : vector<256x128xf32> to vector<256xf32>
    %4 = vector.shape_cast %3 : vector<256xf32> to vector<256x1xf32>
    %cst_3 = arith.constant 1.280000e+02 : f32
    %5 = vector.broadcast %cst_3 : f32 to vector<256x1xf32>
    %6 = arith.divf %4, %5 : vector<256x1xf32>
    %cst_4 = arith.constant 9.99999997E-7 : f32
    %7 = vector.broadcast %cst_4 : f32 to vector<256x1xf32>
    %8 = arith.addf %6, %7 : vector<256x1xf32>
    %9 = math.rsqrt %8 : vector<256x1xf32>
    %10 = vector.broadcast %9 : vector<256x1xf32> to vector<256x128xf32>
    %11 = arith.mulf %1, %10 : vector<256x128xf32>
    %12 = arith.truncf %11 : vector<256x128xf32> to vector<256x128xbf16>
    %c0_5 = arith.constant 0 : index
    %c0_6 = arith.constant 0 : index
    %13 = vector.load %arg3[%c0_5, %c0_6] : memref<128x384xbf16, #tpu.memory_space<vmem>>, vector<128x384xbf16>
    %cst_7 = arith.constant dense<0.000000e+00> : vector<256x384xf32>
    %14 = tpu.matmul %12, %13, %cst_7 {dimension_numbers = #tpu.dot_dimension_numbers<[1], [0], [0], [1], [0, 0, 1, 1], [], []>} : vector<256x128xbf16>, vector<128x384xbf16>, vector<256x384xf32> -> vector<256x384xf32>
    %15 = vector.extract_strided_slice %14 {offsets = [0, 0], sizes = [256, 128], strides = [1, 1]} : vector<256x384xf32> to vector<256x128xf32>
    %16 = vector.extract_strided_slice %14 {offsets = [0, 128], sizes = [256, 128], strides = [1, 1]} : vector<256x384xf32> to vector<256x128xf32>
    %17 = vector.extract_strided_slice %14 {offsets = [0, 256], sizes = [256, 128], strides = [1, 1]} : vector<256x384xf32> to vector<256x128xf32>
    %18 = arith.mulf %0, %0 : vector<256x128xf32>
    %cst_8 = arith.constant dense<0.000000e+00> : vector<256xf32>
    %19 = vector.multi_reduction <add>, %18, %cst_8 [1] : vector<256x128xf32> to vector<256xf32>
    %20 = vector.shape_cast %19 : vector<256xf32> to vector<256x1xf32>
    %cst_9 = arith.constant 1.280000e+02 : f32
    %21 = vector.broadcast %cst_9 : f32 to vector<256x1xf32>
    %22 = arith.divf %20, %21 : vector<256x1xf32>
    %cst_10 = arith.constant 9.99999997E-7 : f32
    %23 = vector.broadcast %cst_10 : f32 to vector<256x1xf32>
    %24 = arith.addf %22, %23 : vector<256x1xf32>
    %25 = math.rsqrt %24 : vector<256x1xf32>
    %26 = vector.broadcast %25 : vector<256x1xf32> to vector<256x128xf32>
    %27 = arith.mulf %0, %26 : vector<256x128xf32>
    %cst_11 = arith.constant 1.000000e+00 : f32
    %28 = vector.broadcast %cst_11 : f32 to vector<256x128xf32>
    %29 = arith.addf %28, %15 : vector<256x128xf32>
    %30 = arith.mulf %27, %29 : vector<256x128xf32>
    %31 = arith.addf %30, %16 : vector<256x128xf32>
    %32 = arith.truncf %31 : vector<256x128xf32> to vector<256x128xbf16>
    %c0_12 = arith.constant 0 : index
    %c0_13 = arith.constant 0 : index
    %33 = vector.load %arg4[%c0_12, %c0_13] : memref<128x256xbf16, #tpu.memory_space<vmem>>, vector<128x256xbf16>
    %cst_14 = arith.constant dense<0.000000e+00> : vector<256x256xf32>
    %34 = tpu.matmul %32, %33, %cst_14 {dimension_numbers = #tpu.dot_dimension_numbers<[1], [0], [0], [1], [0, 0, 1, 1], [], []>} : vector<256x128xbf16>, vector<128x256xbf16>, vector<256x256xf32> -> vector<256x256xf32>
    %35 = arith.negf %34 : vector<256x256xf32>
    %36 = math.exp %35 : vector<256x256xf32>
    %cst_15 = arith.constant 1.000000e+00 : f32
    %37 = vector.broadcast %cst_15 : f32 to vector<256x256xf32>
    %38 = arith.addf %37, %36 : vector<256x256xf32>
    %39 = arith.divf %37, %38 : vector<256x256xf32>
    %40 = arith.mulf %34, %39 : vector<256x256xf32>
    %41 = arith.truncf %40 : vector<256x256xf32> to vector<256x256xbf16>
    %c0_16 = arith.constant 0 : index
    %c0_17 = arith.constant 0 : index
    %42 = vector.load %arg5[%c0_16, %c0_17] : memref<256x128xbf16, #tpu.memory_space<vmem>>, vector<256x128xbf16>
    %cst_18 = arith.constant dense<0.000000e+00> : vector<256x128xf32>
    %43 = tpu.matmul %41, %42, %cst_18 {dimension_numbers = #tpu.dot_dimension_numbers<[1], [0], [0], [1], [0, 0, 1, 1], [], []>} : vector<256x256xbf16>, vector<256x128xbf16>, vector<256x128xf32> -> vector<256x128xf32>
    %44 = arith.mulf %43, %17 : vector<256x128xf32>
    %45 = arith.addf %0, %44 : vector<256x128xf32>
    %c0_19 = arith.constant 0 : index
    %c0_20 = arith.constant 0 : index
    %46 = vector.load %arg6[%c0_19, %c0_20] : memref<256x128xf32, #tpu.memory_space<vmem>>, vector<256x128xf32>
    tpu.vector_store %arg6[%c0_19, %c0_20], %45 {strides = array<i32>} : memref<256x128xf32, #tpu.memory_space<vmem>>, vector<256x128xf32>,
    return
  }
  func.func @transform_0(%arg0: i32) -> (i32, i32) {
    %c0_i32 = arith.constant 0 : i32
    %c0_i32_0 = arith.constant 0 : i32
    return %arg0, %c0_i32 : i32, i32
  }
  func.func @transform_1(%arg0: i32) -> (i32, i32) {
    %c0_i32 = arith.constant 0 : i32
    %c0_i32_0 = arith.constant 0 : i32
    return %arg0, %c0_i32 : i32, i32
  }
  func.func @transform_2(%arg0: i32) -> (i32, i32) {
    %c0_i32 = arith.constant 0 : i32
    %c0_i32_0 = arith.constant 0 : i32
    %c0_i32_1 = arith.constant 0 : i32
    return %c0_i32, %c0_i32_0 : i32, i32
  }
  func.func @transform_3(%arg0: i32) -> (i32, i32) {
    %c0_i32 = arith.constant 0 : i32
    %c0_i32_0 = arith.constant 0 : i32
    %c0_i32_1 = arith.constant 0 : i32
    return %c0_i32, %c0_i32_0 : i32, i32
  }
  func.func @transform_4(%arg0: i32) -> (i32, i32) {
    %c0_i32 = arith.constant 0 : i32
    %c0_i32_0 = arith.constant 0 : i32
    %c0_i32_1 = arith.constant 0 : i32
    return %c0_i32, %c0_i32_0 : i32, i32
  }
  func.func @transform_5(%arg0: i32) -> (i32, i32) {
    %c0_i32 = arith.constant 0 : i32
    %c0_i32_0 = arith.constant 0 : i32
    return %arg0, %c0_i32 : i32, i32
  }
}

</mosaic_0001>

<llo_original>
// kernel: tpu_custom_call.1
$region0: #{tpu_custom_call.1}
  #allocation0 [shape = 'u32[]', space=smem, size = 0x4, offset = 0x4, fixed_abs, tag = 'smem constant byte address 0x4 - core index']
  #allocation1 [shape = 'u32[144,128]{1,0:T(1,128)}', space=vmem, size = 0x12000, scoped, tag = 'internal scratch']
  %s0 = inlined_call_operand.hbm [shape: f32[256,128], index: 0, kind: input, shape index: {}]
  %s1 = inlined_call_operand.hbm [shape: f32[256,128], index: 1, kind: input, shape index: {}]
  %s2 = inlined_call_operand.hbm [shape: bf16[128,384], index: 2, kind: input, shape index: {}]
  %s3 = inlined_call_operand.hbm [shape: bf16[128,256], index: 3, kind: input, shape index: {}]
  %s4 = inlined_call_operand.hbm [shape: bf16[256,128], index: 4, kind: input, shape index: {}]
  %s5 = inlined_call_operand.hbm [shape: f32[256,128], index: 5, kind: output, shape index: {}]
  %s6 = sld [smem:[#allocation0]]
  $region50: #{tpu_custom_call.1} parent=0
    _
  %s8 = ssub.s32 1, %s6
  %s9 = scalar_select 0, %s8, %s6
  $region1: #{tpu_custom_call.1} parent=0
    #allocation2 [shape = 'u8[131072]{0}', space=vmem, size = 0x20000, scoped, tag = 'input window, operand 0, single buffered']
    #allocation3 [shape = 's32[1]{0}', space=sflag, size = 0x4, scoped, tag = 'scoped memory for tpu_custom_call.1']
    #allocation4 [shape = 's32[1]{0}', space=sflag, size = 0x4, scoped, tag = 'scoped memory for tpu_custom_call.1']
    #allocation5 [shape = 'u8[131072]{0}', space=vmem, size = 0x20000, scoped, tag = 'input window, operand 1, single buffered']
    #allocation6 [shape = 's32[1]{0}', space=sflag, size = 0x4, scoped, tag = 'scoped memory for tpu_custom_call.1']
    #allocation7 [shape = 'u8[98304]{0}', space=vmem, size = 0x18000, scoped, tag = 'input window, operand 2, single buffered']
    #allocation8 [shape = 'u8[65536]{0}', space=vmem, size = 0x10000, scoped, tag = 'input window, operand 3, single buffered']
    #allocation9 [shape = 's32[1]{0}', space=sflag, size = 0x4, scoped, tag = 'scoped memory for tpu_custom_call.1']
    #allocation10 [shape = 'u8[65536]{0}', space=vmem, size = 0x10000, scoped, tag = 'input window, operand 4, single buffered']
    #allocation11 [shape = 'u8[131072]{0}', space=vmem, size = 0x20000, scoped, tag = 'output window, operand 0, single buffered']
    %10 = vsyncpa [#allocation3], 0
    %11 = vsyncpa [#allocation6], 0
    %12 = vsyncpa [#allocation9], 0
    %13 = vsyncpa [#allocation4], 0
    // Predicated region
    $region2: #{tpu_custom_call.1} parent=1 // pred_check
      _
    $region3: #{tpu_custom_call.1} parent=1 // pred_check_branch
      %15 = sbr.rel (0) target = $region5
    $region4: #{tpu_custom_call.1} parent=1 // pred_region
      %s17 = ssub.s32 4096, 4096
      %18 = vsyncadd [#allocation3], %s17
      %s19 = sshll.u32 [#allocation2], 4
      %s20 = int_to_ptr.vmem [resolvable:$true] %s19
      %25 = dma.hbm_to_vmem [thread:$0]  %s0, 4096, %s20, [#allocation3], 128, 128, 8
    $region5: #{tpu_custom_call.1} parent=1 // pred_fallthru
      _
    // Predicated region
    $region6: #{tpu_custom_call.1} parent=1 // pred_check
      _
    $region7: #{tpu_custom_call.1} parent=1 // pred_check_branch
      %27 = sbr.rel (0) target = $region9
    $region8: #{tpu_custom_call.1} parent=1 // pred_region
      %s29 = ssub.s32 4096, 4096
      %30 = vsyncadd [#allocation6], %s29
      %s31 = sshll.u32 [#allocation5], 4
      %s32 = int_to_ptr.vmem [resolvable:$true] %s31
      %37 = dma.hbm_to_vmem [thread:$0]  %s1, 4096, %s32, [#allocation6], 128, 128, 8
    $region9: #{tpu_custom_call.1} parent=1 // pred_fallthru
      _
    // Predicated region
    $region10: #{tpu_custom_call.1} parent=1 // pred_check
      _
    $region11: #{tpu_custom_call.1} parent=1 // pred_check_branch
      %39 = sbr.rel (0) target = $region13
    $region12: #{tpu_custom_call.1} parent=1 // pred_region
      %s41 = ssub.s32 3072, 3072
      %42 = vsyncadd [#allocation6], %s41
      %s43 = sshll.u32 [#allocation7], 4
      %s44 = int_to_ptr.vmem [resolvable:$true] %s43
      %49 = dma.hbm_to_vmem [thread:$0]  %s2, 3072, %s44, [#allocation6], 192, 192, 12
    $region13: #{tpu_custom_call.1} parent=1 // pred_fallthru
      _
    // Predicated region
    $region14: #{tpu_custom_call.1} parent=1 // pred_check
      _
    $region15: #{tpu_custom_call.1} parent=1 // pred_check_branch
      %51 = sbr.rel (0) target = $region17
    $region16: #{tpu_custom_call.1} parent=1 // pred_region
      %s53 = ssub.s32 2048, 2048
      %54 = vsyncadd [#allocation9], %s53
      %s55 = sshll.u32 [#allocation8], 4
      %s56 = int_to_ptr.vmem [resolvable:$true] %s55
      %61 = dma.hbm_to_vmem [thread:$0]  %s3, 2048, %s56, [#allocation9], 128, 128, 8
    $region17: #{tpu_custom_call.1} parent=1 // pred_fallthru
      _
    // Predicated region
    $region18: #{tpu_custom_call.1} parent=1 // pred_check
      _
    $region19: #{tpu_custom_call.1} parent=1 // pred_check_branch
      %63 = sbr.rel (0) target = $region21
    $region20: #{tpu_custom_call.1} parent=1 // pred_region
      %s65 = ssub.s32 2048, 2048
      %66 = vsyncadd [#allocation9], %s65
      %s67 = sshll.u32 [#allocation10], 4
      %s68 = int_to_ptr.vmem [resolvable:$true] %s67
      %73 = dma.hbm_to_vmem [thread:$0]  %s4, 2048, %s68, [#allocation9], 64, 64, 4
    $region21: #{tpu_custom_call.1} parent=1 // pred_fallthru
      _
    // Predicated region
    $region22: #{tpu_custom_call.1} parent=1 // pred_check
      _
    $region23: #{tpu_custom_call.1} parent=1 // pred_check_branch
      %75 = sbr.rel (0) target = $region25
    $region24: #{tpu_custom_call.1} parent=1 // pred_region
      %76 = dma.done [#allocation3], 4096
    $region25: #{tpu_custom_call.1} parent=1 // pred_fallthru
      _
    // Predicated region
    $region26: #{tpu_custom_call.1} parent=1 // pred_check
      _
    $region27: #{tpu_custom_call.1} parent=1 // pred_check_branch
      %78 = sbr.rel (0) target = $region29
    $region28: #{tpu_custom_call.1} parent=1 // pred_region
      %79 = dma.done [#allocation6], 4096
    $region29: #{tpu_custom_call.1} parent=1 // pred_fallthru
      _
    // Predicated region
    $region30: #{tpu_custom_call.1} parent=1 // pred_check
      _
    $region31: #{tpu_custom_call.1} parent=1 // pred_check_branch
      %81 = sbr.rel (0) target = $region33
    $region32: #{tpu_custom_call.1} parent=1 // pred_region
      %82 = dma.done [#allocation6], 3072
    $region33: #{tpu_custom_call.1} parent=1 // pred_fallthru
      _
    // Predicated region
    $region34: #{tpu_custom_call.1} parent=1 // pred_check
      _
    $region35: #{tpu_custom_call.1} parent=1 // pred_check_branch
      %84 = sbr.rel (0) target = $region37
    $region36: #{tpu_custom_call.1} parent=1 // pred_region
      %85 = dma.done [#allocation9], 2048
    $region37: #{tpu_custom_call.1} parent=1 // pred_fallthru
      _
    // Predicated region
    $region38: #{tpu_custom_call.1} parent=1 // pred_check
      _
    $region39: #{tpu_custom_call.1} parent=1 // pred_check_branch
      %87 = sbr.rel (0) target = $region41
    $region40: #{tpu_custom_call.1} parent=1 // pred_region
      %88 = dma.done [#allocation9], 2048
    $region41: #{tpu_custom_call.1} parent=1 // pred_fallthru
      _
    %v90 = vld [vmem:[#allocation2] sm:$0xff]
    %v91 = vld [vmem:[#allocation2 + $0x8] sm:$0xff]
    %v92 = vld [vmem:[#allocation2 + $0x10] sm:$0xff]
    %v93 = vld [vmem:[#allocation2 + $0x18] sm:$0xff]
    %v94 = vld [vmem:[#allocation2 + $0x20] sm:$0xff]
    %v95 = vld [vmem:[#allocation2 + $0x28] sm:$0xff]
    %v96 = vld [vmem:[#allocation2 + $0x30] sm:$0xff]
    %v97 = vld [vmem:[#allocation2 + $0x38] sm:$0xff]
    %v98 = vld [vmem:[#allocation2 + $0x40] sm:$0xff]
    %v99 = vld [vmem:[#allocation2 + $0x48] sm:$0xff]
    %v100 = vld [vmem:[#allocation2 + $0x50] sm:$0xff]
    %v101 = vld [vmem:[#allocation2 + $0x58] sm:$0xff]
    %v102 = vld [vmem:[#allocation2 + $0x60] sm:$0xff]
    %v103 = vld [vmem:[#allocation2 + $0x68] sm:$0xff]
    %v104 = vld [vmem:[#allocation2 + $0x70] sm:$0xff]
    %v105 = vld [vmem:[#allocation2 + $0x78] sm:$0xff]
    %v106 = vld [vmem:[#allocation2 + $0x80] sm:$0xff]
    %v107 = vld [vmem:[#allocation2 + $0x88] sm:$0xff]
    %v108 = vld [vmem:[#allocation2 + $0x90] sm:$0xff]
    %v109 = vld [vmem:[#allocation2 + $0x98] sm:$0xff]
    %v110 = vld [vmem:[#allocation2 + $0xa0] sm:$0xff]
    %v111 = vld [vmem:[#allocation2 + $0xa8] sm:$0xff]
    %v112 = vld [vmem:[#allocation2 + $0xb0] sm:$0xff]
    %v113 = vld [vmem:[#allocation2 + $0xb8] sm:$0xff]
    %v114 = vld [vmem:[#allocation2 + $0xc0] sm:$0xff]
    %v115 = vld [vmem:[#allocation2 + $0xc8] sm:$0xff]
    %v116 = vld [vmem:[#allocation2 + $0xd0] sm:$0xff]
    %v117 = vld [vmem:[#allocation2 + $0xd8] sm:$0xff]
    %v118 = vld [vmem:[#allocation2 + $0xe0] sm:$0xff]
    %v119 = vld [vmem:[#allocation2 + $0xe8] sm:$0xff]
    %v120 = vld [vmem:[#allocation2 + $0xf0] sm:$0xff]
    %v121 = vld [vmem:[#allocation2 + $0xf8] sm:$0xff]
    %v122 = vld [vmem:[#allocation5] sm:$0xff]
    %v123 = vld [vmem:[#allocation5 + $0x8] sm:$0xff]
    %v124 = vld [vmem:[#allocation5 + $0x10] sm:$0xff]
    %v125 = vld [vmem:[#allocation5 + $0x18] sm:$0xff]
    %v126 = vld [vmem:[#allocation5 + $0x20] sm:$0xff]
    %v127 = vld [vmem:[#allocation5 + $0x28] sm:$0xff]
    %v128 = vld [vmem:[#allocation5 + $0x30] sm:$0xff]
    %v129 = vld [vmem:[#allocation5 + $0x38] sm:$0xff]
    %v130 = vld [vmem:[#allocation5 + $0x40] sm:$0xff]
    %v131 = vld [vmem:[#allocation5 + $0x48] sm:$0xff]
    %v132 = vld [vmem:[#allocation5 + $0x50] sm:$0xff]
    %v133 = vld [vmem:[#allocation5 + $0x58] sm:$0xff]
    %v134 = vld [vmem:[#allocation5 + $0x60] sm:$0xff]
    %v135 = vld [vmem:[#allocation5 + $0x68] sm:$0xff]
    %v136 = vld [vmem:[#allocation5 + $0x70] sm:$0xff]
    %v137 = vld [vmem:[#allocation5 + $0x78] sm:$0xff]
    %v138 = vld [vmem:[#allocation5 + $0x80] sm:$0xff]
    %v139 = vld [vmem:[#allocation5 + $0x88] sm:$0xff]
    %v140 = vld [vmem:[#allocation5 + $0x90] sm:$0xff]
    %v141 = vld [vmem:[#allocation5 + $0x98] sm:$0xff]
    %v142 = vld [vmem:[#allocation5 + $0xa0] sm:$0xff]
    %v143 = vld [vmem:[#allocation5 + $0xa8] sm:$0xff]
    %v144 = vld [vmem:[#allocation5 + $0xb0] sm:$0xff]
    %v145 = vld [vmem:[#allocation5 + $0xb8] sm:$0xff]
    %v146 = vld [vmem:[#allocation5 + $0xc0] sm:$0xff]
    %v147 = vld [vmem:[#allocation5 + $0xc8] sm:$0xff]
    %v148 = vld [vmem:[#allocation5 + $0xd0] sm:$0xff]
    %v149 = vld [vmem:[#allocation5 + $0xd8] sm:$0xff]
    %v150 = vld [vmem:[#allocation5 + $0xe0] sm:$0xff]
    %v151 = vld [vmem:[#allocation5 + $0xe8] sm:$0xff]
    %v152 = vld [vmem:[#allocation5 + $0xf0] sm:$0xff]
    %v153 = vld [vmem:[#allocation5 + $0xf8] sm:$0xff]
    %v154 = vmul.f32 %v122, %v122
    %v155 = vmul.f32 %v123, %v123
    %v156 = vmul.f32 %v124, %v124
    %v157 = vmul.f32 %v125, %v125
    %v158 = vmul.f32 %v126, %v126
    %v159 = vmul.f32 %v127, %v127
    %v160 = vmul.f32 %v128, %v128
    %v161 = vmul.f32 %v129, %v129
    %v162 = vmul.f32 %v130, %v130
    %v163 = vmul.f32 %v131, %v131
    %v164 = vmul.f32 %v132, %v132
    %v165 = vmul.f32 %v133, %v133
    %v166 = vmul.f32 %v134, %v134
    %v167 = vmul.f32 %v135, %v135
    %v168 = vmul.f32 %v136, %v136
    %v169 = vmul.f32 %v137, %v137
    %v170 = vmul.f32 %v138, %v138
    %v171 = vmul.f32 %v139, %v139
    %v172 = vmul.f32 %v140, %v140
    %v173 = vmul.f32 %v141, %v141
    %v174 = vmul.f32 %v142, %v142
    %v175 = vmul.f32 %v143, %v143
    %v176 = vmul.f32 %v144, %v144
    %v177 = vmul.f32 %v145, %v145
    %v178 = vmul.f32 %v146, %v146
    %v179 = vmul.f32 %v147, %v147
    %v180 = vmul.f32 %v148, %v148
    %v181 = vmul.f32 %v149, %v149
    %v182 = vmul.f32 %v150, %v150
    %v183 = vmul.f32 %v151, %v151
    %v184 = vmul.f32 %v152, %v152
    %v185 = vmul.f32 %v153, %v153
    %186 = vadd.xlane.f32.xlu0 %v154
    %v187 = vpop.xlane.xlu0 %186
    %188 = vadd.xlane.f32.xlu0 %v155
    %v189 = vpop.xlane.xlu0 %188
    %190 = vadd.xlane.f32.xlu0 %v156
    %v191 = vpop.xlane.xlu0 %190
    %192 = vadd.xlane.f32.xlu0 %v157
    %v193 = vpop.xlane.xlu0 %192
    %194 = vadd.xlane.f32.xlu0 %v158
    %v195 = vpop.xlane.xlu0 %194
    %196 = vadd.xlane.f32.xlu0 %v159
    %v197 = vpop.xlane.xlu0 %196
    %198 = vadd.xlane.f32.xlu0 %v160
    %v199 = vpop.xlane.xlu0 %198
    %200 = vadd.xlane.f32.xlu0 %v161
    %v201 = vpop.xlane.xlu0 %200
    %202 = vadd.xlane.f32.xlu0 %v162
    %v203 = vpop.xlane.xlu0 %202
    %204 = vadd.xlane.f32.xlu0 %v163
    %v205 = vpop.xlane.xlu0 %204
    %206 = vadd.xlane.f32.xlu0 %v164
    %v207 = vpop.xlane.xlu0 %206
    %208 = vadd.xlane.f32.xlu0 %v165
    %v209 = vpop.xlane.xlu0 %208
    %210 = vadd.xlane.f32.xlu0 %v166
    %v211 = vpop.xlane.xlu0 %210
    %212 = vadd.xlane.f32.xlu0 %v167
    %v213 = vpop.xlane.xlu0 %212
    %214 = vadd.xlane.f32.xlu0 %v168
    %v215 = vpop.xlane.xlu0 %214
    %216 = vadd.xlane.f32.xlu0 %v169
    %v217 = vpop.xlane.xlu0 %216
    %218 = vadd.xlane.f32.xlu0 %v170
    %v219 = vpop.xlane.xlu0 %218
    %220 = vadd.xlane.f32.xlu0 %v171
    %v221 = vpop.xlane.xlu0 %220
    %222 = vadd.xlane.f32.xlu0 %v172
    %v223 = vpop.xlane.xlu0 %222
    %224 = vadd.xlane.f32.xlu0 %v173
    %v225 = vpop.xlane.xlu0 %224
    %226 = vadd.xlane.f32.xlu0 %v174
    %v227 = vpop.xlane.xlu0 %226
    %228 = vadd.xlane.f32.xlu0 %v175
    %v229 = vpop.xlane.xlu0 %228
    %230 = vadd.xlane.f32.xlu0 %v176
    %v231 = vpop.xlane.xlu0 %230
    %232 = vadd.xlane.f32.xlu0 %v177
    %v233 = vpop.xlane.xlu0 %232
    %234 = vadd.xlane.f32.xlu0 %v178
    %v235 = vpop.xlane.xlu0 %234
    %236 = vadd.xlane.f32.xlu0 %v179
    %v237 = vpop.xlane.xlu0 %236
    %238 = vadd.xlane.f32.xlu0 %v180
    %v239 = vpop.xlane.xlu0 %238
    %240 = vadd.xlane.f32.xlu0 %v181
    %v241 = vpop.xlane.xlu0 %240
    %242 = vadd.xlane.f32.xlu0 %v182
    %v243 = vpop.xlane.xlu0 %242
    %244 = vadd.xlane.f32.xlu0 %v183
    %v245 = vpop.xlane.xlu0 %244
    %246 = vadd.xlane.f32.xlu0 %v184
    %v247 = vpop.xlane.xlu0 %246
    %248 = vadd.xlane.f32.xlu0 %v185
    %v249 = vpop.xlane.xlu0 %248
    %v250 = vrcp.pop 128.0
    %v251 = vmul.f32 %v187, %v250
    %v252 = vmul.f32 %v189, %v250
    %v253 = vmul.f32 %v191, %v250
    %v254 = vmul.f32 %v193, %v250
    %v255 = vmul.f32 %v195, %v250
    %v256 = vmul.f32 %v197, %v250
    %v257 = vmul.f32 %v199, %v250
    %v258 = vmul.f32 %v201, %v250
    %v259 = vmul.f32 %v203, %v250
    %v260 = vmul.f32 %v205, %v250
    %v261 = vmul.f32 %v207, %v250
    %v262 = vmul.f32 %v209, %v250
    %v263 = vmul.f32 %v211, %v250
    %v264 = vmul.f32 %v213, %v250
    %v265 = vmul.f32 %v215, %v250
    %v266 = vmul.f32 %v217, %v250
    %v267 = vmul.f32 %v219, %v250
    %v268 = vmul.f32 %v221, %v250
    %v269 = vmul.f32 %v223, %v250
    %v270 = vmul.f32 %v225, %v250
    %v271 = vmul.f32 %v227, %v250
    %v272 = vmul.f32 %v229, %v250
    %v273 = vmul.f32 %v231, %v250
    %v274 = vmul.f32 %v233, %v250
    %v275 = vmul.f32 %v235, %v250
    %v276 = vmul.f32 %v237, %v250
    %v277 = vmul.f32 %v239, %v250
    %v278 = vmul.f32 %v241, %v250
    %v279 = vmul.f32 %v243, %v250
    %v280 = vmul.f32 %v245, %v250
    %v281 = vmul.f32 %v247, %v250
    %v282 = vmul.f32 %v249, %v250
    %v283 = vadd.f32 %v251, 1e-06
    %v284 = vadd.f32 %v252, 1e-06
    %v285 = vadd.f32 %v253, 1e-06
    %v286 = vadd.f32 %v254, 1e-06
    %v287 = vadd.f32 %v255, 1e-06
    %v288 = vadd.f32 %v256, 1e-06
    %v289 = vadd.f32 %v257, 1e-06
    %v290 = vadd.f32 %v258, 1e-06
    %v291 = vadd.f32 %v259, 1e-06
    %v292 = vadd.f32 %v260, 1e-06
    %v293 = vadd.f32 %v261, 1e-06
    %v294 = vadd.f32 %v262, 1e-06
    %v295 = vadd.f32 %v263, 1e-06
    %v296 = vadd.f32 %v264, 1e-06
    %v297 = vadd.f32 %v265, 1e-06
    %v298 = vadd.f32 %v266, 1e-06
    %v299 = vadd.f32 %v267, 1e-06
    %v300 = vadd.f32 %v268, 1e-06
    %v301 = vadd.f32 %v269, 1e-06
    %v302 = vadd.f32 %v270, 1e-06
    %v303 = vadd.f32 %v271, 1e-06
    %v304 = vadd.f32 %v272, 1e-06
    %v305 = vadd.f32 %v273, 1e-06
    %v306 = vadd.f32 %v274, 1e-06
    %v307 = vadd.f32 %v275, 1e-06
    %v308 = vadd.f32 %v276, 1e-06
    %v309 = vadd.f32 %v277, 1e-06
    %v310 = vadd.f32 %v278, 1e-06
    %v311 = vadd.f32 %v279, 1e-06
    %v312 = vadd.f32 %v280, 1e-06
    %v313 = vadd.f32 %v281, 1e-06
    %v314 = vadd.f32 %v282, 1e-06
    %v315 = vrsqrt.pop %v283
    %v316 = vrsqrt.pop %v284
    %v317 = vrsqrt.pop %v285
    %v318 = vrsqrt.pop %v286
    %v319 = vrsqrt.pop %v287
    %v320 = vrsqrt.pop %v288
    %v321 = vrsqrt.pop %v289
    %v322 = vrsqrt.pop %v290
    %v323 = vrsqrt.pop %v291
    %v324 = vrsqrt.pop %v292
    %v325 = vrsqrt.pop %v293
    %v326 = vrsqrt.pop %v294
    %v327 = vrsqrt.pop %v295
    %v328 = vrsqrt.pop %v296
    %v329 = vrsqrt.pop %v297
    %v330 = vrsqrt.pop %v298
    %v331 = vrsqrt.pop %v299
    %v332 = vrsqrt.pop %v300
    %v333 = vrsqrt.pop %v301
    %v334 = vrsqrt.pop %v302
    %v335 = vrsqrt.pop %v303
    %v336 = vrsqrt.pop %v304
    %v337 = vrsqrt.pop %v305
    %v338 = vrsqrt.pop %v306
    %v339 = vrsqrt.pop %v307
    %v340 = vrsqrt.pop %v308
    %v341 = vrsqrt.pop %v309
    %v342 = vrsqrt.pop %v310
    %v343 = vrsqrt.pop %v311
    %v344 = vrsqrt.pop %v312
    %v345 = vrsqrt.pop %v313
    %v346 = vrsqrt.pop %v314
    %v347 = vmul.f32 %v122, %v315
    %v348 = vmul.f32 %v123, %v316
    %v349 = vmul.f32 %v124, %v317
    %v350 = vmul.f32 %v125, %v318
    %v351 = vmul.f32 %v126, %v319
    %v352 = vmul.f32 %v127, %v320
    %v353 = vmul.f32 %v128, %v321
    %v354 = vmul.f32 %v129, %v322
    %v355 = vmul.f32 %v130, %v323
    %v356 = vmul.f32 %v131, %v324
    %v357 = vmul.f32 %v132, %v325
    %v358 = vmul.f32 %v133, %v326
    %v359 = vmul.f32 %v134, %v327
    %v360 = vmul.f32 %v135, %v328
    %v361 = vmul.f32 %v136, %v329
    %v362 = vmul.f32 %v137, %v330
    %v363 = vmul.f32 %v138, %v331
    %v364 = vmul.f32 %v139, %v332
    %v365 = vmul.f32 %v140, %v333
    %v366 = vmul.f32 %v141, %v334
    %v367 = vmul.f32 %v142, %v335
    %v368 = vmul.f32 %v143, %v336
    %v369 = vmul.f32 %v144, %v337
    %v370 = vmul.f32 %v145, %v338
    %v371 = vmul.f32 %v146, %v339
    %v372 = vmul.f32 %v147, %v340
    %v373 = vmul.f32 %v148, %v341
    %v374 = vmul.f32 %v149, %v342
    %v375 = vmul.f32 %v150, %v343
    %v376 = vmul.f32 %v151, %v344
    %v377 = vmul.f32 %v152, %v345
    %v378 = vmul.f32 %v153, %v346
    %v379 = vpack.c.bf16 %v348, %v347
    %v380 = vpack.c.bf16 %v350, %v349
    %v381 = vpack.c.bf16 %v352, %v351
    %v382 = vpack.c.bf16 %v354, %v353
    %v383 = vpack.c.bf16 %v356, %v355
    %v384 = vpack.c.bf16 %v358, %v357
    %v385 = vpack.c.bf16 %v360, %v359
    %v386 = vpack.c.bf16 %v362, %v361
    %v387 = vpack.c.bf16 %v364, %v363
    %v388 = vpack.c.bf16 %v366, %v365
    %v389 = vpack.c.bf16 %v368, %v367
    %v390 = vpack.c.bf16 %v370, %v369
    %v391 = vpack.c.bf16 %v372, %v371
    %v392 = vpack.c.bf16 %v374, %v373
    %v393 = vpack.c.bf16 %v376, %v375
    %v394 = vpack.c.bf16 %v378, %v377
    %v395 = vld [vmem:[#allocation7] sm:$0xff]
    %v396 = vld [vmem:[#allocation7 + $0x8] sm:$0xf]
    %v397 = vld [vmem:[#allocation7 + $0xc] sm:$0xff]
    %v398 = vld [vmem:[#allocation7 + $0x14] sm:$0xf]
    %v399 = vld [vmem:[#allocation7 + $0x18] sm:$0xff]
    %v400 = vld [vmem:[#allocation7 + $0x20] sm:$0xf]
    %v401 = vld [vmem:[#allocation7 + $0x24] sm:$0xff]
    %v402 = vld [vmem:[#allocation7 + $0x2c] sm:$0xf]
    %v403 = vld [vmem:[#allocation7 + $0x30] sm:$0xff]
    %v404 = vld [vmem:[#allocation7 + $0x38] sm:$0xf]
    %v405 = vld [vmem:[#allocation7 + $0x3c] sm:$0xff]
    %v406 = vld [vmem:[#allocation7 + $0x44] sm:$0xf]
    %v407 = vld [vmem:[#allocation7 + $0x48] sm:$0xff]
    %v408 = vld [vmem:[#allocation7 + $0x50] sm:$0xf]
    %v409 = vld [vmem:[#allocation7 + $0x54] sm:$0xff]
    %v410 = vld [vmem:[#allocation7 + $0x5c] sm:$0xf]
    %v411 = vld [vmem:[#allocation7 + $0x60] sm:$0xff]
    %v412 = vld [vmem:[#allocation7 + $0x68] sm:$0xf]
    %v413 = vld [vmem:[#allocation7 + $0x6c] sm:$0xff]
    %v414 = vld [vmem:[#allocation7 + $0x74] sm:$0xf]
    %v415 = vld [vmem:[#allocation7 + $0x78] sm:$0xff]
    %v416 = vld [vmem:[#allocation7 + $0x80] sm:$0xf]
    %v417 = vld [vmem:[#allocation7 + $0x84] sm:$0xff]
    %v418 = vld [vmem:[#allocation7 + $0x8c] sm:$0xf]
    %v419 = vld [vmem:[#allocation7 + $0x90] sm:$0xff]
    %v420 = vld [vmem:[#allocation7 + $0x98] sm:$0xf]
    %v421 = vld [vmem:[#allocation7 + $0x9c] sm:$0xff]
    %v422 = vld [vmem:[#allocation7 + $0xa4] sm:$0xf]
    %v423 = vld [vmem:[#allocation7 + $0xa8] sm:$0xff]
    %v424 = vld [vmem:[#allocation7 + $0xb0] sm:$0xf]
    %v425 = vld [vmem:[#allocation7 + $0xb4] sm:$0xff]
    %v426 = vld [vmem:[#allocation7 + $0xbc] sm:$0xf]
    %v459 = vunpack.c.l.b16 %v395
    %v460 = vunpack.c.h.b16 %v395
    %v461 = vunpack.c.l.b16 %v396
    %v462 = vunpack.c.l.b16 %v397
    %v463 = vunpack.c.h.b16 %v397
    %v464 = vunpack.c.l.b16 %v398
    %v465 = vunpack.c.l.b16 %v399
    %v466 = vunpack.c.h.b16 %v399
    %v467 = vunpack.c.l.b16 %v400
    %v468 = vunpack.c.l.b16 %v401
    %v469 = vunpack.c.h.b16 %v401
    %v470 = vunpack.c.l.b16 %v402
    %v471 = vunpack.c.l.b16 %v403
    %v472 = vunpack.c.h.b16 %v403
    %v473 = vunpack.c.l.b16 %v404
    %v474 = vunpack.c.l.b16 %v405
    %v475 = vunpack.c.h.b16 %v405
    %v476 = vunpack.c.l.b16 %v406
    %v477 = vunpack.c.l.b16 %v407
    %v478 = vunpack.c.h.b16 %v407
    %v479 = vunpack.c.l.b16 %v408
    %v480 = vunpack.c.l.b16 %v409
    %v481 = vunpack.c.h.b16 %v409
    %v482 = vunpack.c.l.b16 %v410
    %v483 = vunpack.c.l.b16 %v411
    %v484 = vunpack.c.h.b16 %v411
    %v485 = vunpack.c.l.b16 %v412
    %v486 = vunpack.c.l.b16 %v413
    %v487 = vunpack.c.h.b16 %v413
    %v488 = vunpack.c.l.b16 %v414
    %v489 = vunpack.c.l.b16 %v415
    %v490 = vunpack.c.h.b16 %v415
    %v491 = vunpack.c.l.b16 %v416
    %v492 = vunpack.c.l.b16 %v417
    %v493 = vunpack.c.h.b16 %v417
    %v494 = vunpack.c.l.b16 %v418
    %v495 = vunpack.c.l.b16 %v419
    %v496 = vunpack.c.h.b16 %v419
    %v497 = vunpack.c.l.b16 %v420
    %v498 = vunpack.c.l.b16 %v421
    %v499 = vunpack.c.h.b16 %v421
    %v500 = vunpack.c.l.b16 %v422
    %v501 = vunpack.c.l.b16 %v423
    %v502 = vunpack.c.h.b16 %v423
    %v503 = vunpack.c.l.b16 %v424
    %v504 = vunpack.c.l.b16 %v425
    %v505 = vunpack.c.h.b16 %v425
    %v506 = vunpack.c.l.b16 %v426
    %v507 = vpack.c.b16 %v462, %v459
    %v508 = vpack.c.b16 %v463, %v460
    %v509 = vpack.c.b16 %v464, %v461
    %v510 = vpack.c.b16 %v468, %v465
    %v511 = vpack.c.b16 %v469, %v466
    %v512 = vpack.c.b16 %v470, %v467
    %v513 = vpack.c.b16 %v474, %v471
    %v514 = vpack.c.b16 %v475, %v472
    %v515 = vpack.c.b16 %v476, %v473
    %v516 = vpack.c.b16 %v480, %v477
    %v517 = vpack.c.b16 %v481, %v478
    %v518 = vpack.c.b16 %v482, %v479
    %v519 = vpack.c.b16 %v486, %v483
    %v520 = vpack.c.b16 %v487, %v484
    %v521 = vpack.c.b16 %v488, %v485
    %v522 = vpack.c.b16 %v492, %v489
    %v523 = vpack.c.b16 %v493, %v490
    %v524 = vpack.c.b16 %v494, %v491
    %v525 = vpack.c.b16 %v498, %v495
    %v526 = vpack.c.b16 %v499, %v496
    %v527 = vpack.c.b16 %v500, %v497
    %v528 = vpack.c.b16 %v504, %v501
    %v529 = vpack.c.b16 %v505, %v502
    %v530 = vpack.c.b16 %v506, %v503
    %555 = vmatprep.subr.bf16.mxu0 %v508
    %556 = vmatpush1.bf16.msra.mxu0 %v507
    %557 = vmatprep.subr.bf16.mxu0 %v511
    %558 = vmatpush1.bf16.msra.mxu0 %v510
    %559 = vmatprep.subr.bf16.mxu0 %v514
    %560 = vmatpush1.bf16.msra.mxu0 %v513
    %561 = vmatprep.subr.bf16.mxu0 %v517
    %562 = vmatpush1.bf16.msra.mxu0 %v516
    %563 = vmatprep.subr.bf16.mxu0 %v520
    %564 = vmatpush1.bf16.msra.mxu0 %v519
    %565 = vmatprep.subr.bf16.mxu0 %v523
    %566 = vmatpush1.bf16.msra.mxu0 %v522
    %567 = vmatprep.subr.bf16.mxu0 %v526
    %568 = vmatpush1.bf16.msra.mxu0 %v525
    %569 = vmatprep.subr.bf16.mxu0 %v529
    %570 = vmatpush1.bf16.msra.mxu0 %v528
    %571 = vmatprep.subr.bf16.mxu0 0
    %572 = vmatpush1.bf16.msra.mxu0 0
    %573 = vmatprep.subr.bf16.mxu0 0
    %574 = vmatpush1.bf16.msra.mxu0 0
    %575 = vmatprep.subr.bf16.mxu0 0
    %576 = vmatpush1.bf16.msra.mxu0 0
    %577 = vmatprep.subr.bf16.mxu0 0
    %578 = vmatpush1.bf16.msra.mxu0 0
    %579 = vmatprep.subr.bf16.mxu0 0
    %580 = vmatpush1.bf16.msra.mxu0 0
    %581 = vmatprep.subr.bf16.mxu0 0
    %582 = vmatpush1.bf16.msra.mxu0 0
    %583 = vmatprep.subr.bf16.mxu0 0
    %584 = vmatpush1.bf16.msra.mxu0 0
    %585 = vmatprep.subr.bf16.mxu0 0
    %586 = vmatpush1.bf16.msra.mxu0 0
    %587 = vmatprep.mubr.bf16.mxu0 0
    %588 = vmatmul.mubr.bf16.gmra.mrb[0].mxu0 %v379
    %v589 = vpop.f32.mrb[0].mxu0
    %v590 = vadd.f32 0.0, %v589
    %v591 = vpop.f32.mrb[0].mxu0
    %v592 = vadd.f32 0.0, %v591
    %v593 = vpop.f32.mrb[0].mxu0
    %v594 = vadd.f32 0.0, %v593
    %v595 = vpop.f32.mrb[0].mxu0
    %v596 = vadd.f32 0.0, %v595
    %597 = vmatprep.mubr.bf16.mxu0 0
    %598 = vmatmul.mubr.bf16.gmra.mrb[0].mxu0 %v380
    %v599 = vpop.f32.mrb[0].mxu0
    %v600 = vadd.f32 0.0, %v599
    %v601 = vpop.f32.mrb[0].mxu0
    %v602 = vadd.f32 0.0, %v601
    %v603 = vpop.f32.mrb[0].mxu0
    %v604 = vadd.f32 0.0, %v603
    %v605 = vpop.f32.mrb[0].mxu0
    %v606 = vadd.f32 0.0, %v605
    %607 = vmatprep.mubr.bf16.mxu0 0
    %608 = vmatmul.mubr.bf16.gmra.mrb[0].mxu0 %v381
    %v609 = vpop.f32.mrb[0].mxu0
    %v610 = vadd.f32 0.0, %v609
    %v611 = vpop.f32.mrb[0].mxu0
    %v612 = vadd.f32 0.0, %v611
    %v613 = vpop.f32.mrb[0].mxu0
    %v614 = vadd.f32 0.0, %v613
    %v615 = vpop.f32.mrb[0].mxu0
    %v616 = vadd.f32 0.0, %v615
    %617 = vmatprep.mubr.bf16.mxu0 0
    %618 = vmatmul.mubr.bf16.gmra.mrb[0].mxu0 %v382
    %v619 = vpop.f32.mrb[0].mxu0
    %v620 = vadd.f32 0.0, %v619
    %v621 = vpop.f32.mrb[0].mxu0
    %v622 = vadd.f32 0.0, %v621
    %v623 = vpop.f32.mrb[0].mxu0
    %v624 = vadd.f32 0.0, %v623
    %v625 = vpop.f32.mrb[0].mxu0
    %v626 = vadd.f32 0.0, %v625
    %627 = vmatprep.mubr.bf16.mxu0 0
    %628 = vmatmul.mubr.bf16.gmra.mrb[0].mxu0 %v383
    %v629 = vpop.f32.mrb[0].mxu0
    %v630 = vadd.f32 0.0, %v629
    %v631 = vpop.f32.mrb[0].mxu0
    %v632 = vadd.f32 0.0, %v631
    %v633 = vpop.f32.mrb[0].mxu0
    %v634 = vadd.f32 0.0, %v633
    %v635 = vpop.f32.mrb[0].mxu0
    %v636 = vadd.f32 0.0, %v635
    %637 = vmatprep.mubr.bf16.mxu0 0
    %638 = vmatmul.mubr.bf16.gmra.mrb[0].mxu0 %v384
    %v639 = vpop.f32.mrb[0].mxu0
    %v640 = vadd.f32 0.0, %v639
    %v641 = vpop.f32.mrb[0].mxu0
    %v642 = vadd.f32 0.0, %v641
    %v643 = vpop.f32.mrb[0].mxu0
    %v644 = vadd.f32 0.0, %v643
    %v645 = vpop.f32.mrb[0].mxu0
    %v646 = vadd.f32 0.0, %v645
    %647 = vmatprep.mubr.bf16.mxu0 0
    %648 = vmatmul.mubr.bf16.gmra.mrb[0].mxu0 %v385
    %v649 = vpop.f32.mrb[0].mxu0
    %v650 = vadd.f32 0.0, %v649
    %v651 = vpop.f32.mrb[0].mxu0
    %v652 = vadd.f32 0.0, %v651
    %v653 = vpop.f32.mrb[0].mxu0
    %v654 = vadd.f32 0.0, %v653
    %v655 = vpop.f32.mrb[0].mxu0
    %v656 = vadd.f32 0.0, %v655
    %657 = vmatprep.mubr.bf16.mxu0 0
    %658 = vmatmul.mubr.bf16.gmra.mrb[0].mxu0 %v386
    %v659 = vpop.f32.mrb[0].mxu0
    %v660 = vadd.f32 0.0, %v659
    %v661 = vpop.f32.mrb[0].mxu0
    %v662 = vadd.f32 0.0, %v661
    %v663 = vpop.f32.mrb[0].mxu0
    %v664 = vadd.f32 0.0, %v663
    %v665 = vpop.f32.mrb[0].mxu0
    %v666 = vadd.f32 0.0, %v665
    %667 = vmatprep.mubr.bf16.mxu0 0
    %668 = vmatmul.mubr.bf16.gmra.mrb[0].mxu0 %v387
    %v669 = vpop.f32.mrb[0].mxu0
    %v670 = vadd.f32 0.0, %v669
    %v671 = vpop.f32.mrb[0].mxu0
    %v672 = vadd.f32 0.0, %v671
    %v673 = vpop.f32.mrb[0].mxu0
    %v674 = vadd.f32 0.0, %v673
    %v675 = vpop.f32.mrb[0].mxu0
    %v676 = vadd.f32 0.0, %v675
    %677 = vmatprep.mubr.bf16.mxu0 0
    %678 = vmatmul.mubr.bf16.gmra.mrb[0].mxu0 %v388
    %v679 = vpop.f32.mrb[0].mxu0
    %v680 = vadd.f32 0.0, %v679
    %v681 = vpop.f32.mrb[0].mxu0
    %v682 = vadd.f32 0.0, %v681
    %v683 = vpop.f32.mrb[0].mxu0
    %v684 = vadd.f32 0.0, %v683
    %v685 = vpop.f32.mrb[0].mxu0
    %v686 = vadd.f32 0.0, %v685
    %687 = vmatprep.mubr.bf16.mxu0 0
    %688 = vmatmul.mubr.bf16.gmra.mrb[0].mxu0 %v389
    %v689 = vpop.f32.mrb[0].mxu0
    %v690 = vadd.f32 0.0, %v689
    %v691 = vpop.f32.mrb[0].mxu0
    %v692 = vadd.f32 0.0, %v691
    %v693 = vpop.f32.mrb[0].mxu0
    %v694 = vadd.f32 0.0, %v693
    %v695 = vpop.f32.mrb[0].mxu0
    %v696 = vadd.f32 0.0, %v695
    %697 = vmatprep.mubr.bf16.mxu0 0
    %698 = vmatmul.mubr.bf16.gmra.mrb[0].mxu0 %v390
    %v699 = vpop.f32.mrb[0].mxu0
    %v700 = vadd.f32 0.0, %v699
    %v701 = vpop.f32.mrb[0].mxu0
    %v702 = vadd.f32 0.0, %v701
    %v703 = vpop.f32.mrb[0].mxu0
    %v704 = vadd.f32 0.0, %v703
    %v705 = vpop.f32.mrb[0].mxu0
    %v706 = vadd.f32 0.0, %v705
    %707 = vmatprep.mubr.bf16.mxu0 0
    %708 = vmatmul.mubr.bf16.gmra.mrb[0].mxu0 %v391
    %v709 = vpop.f32.mrb[0].mxu0
    %v710 = vadd.f32 0.0, %v709
    %v711 = vpop.f32.mrb[0].mxu0
    %v712 = vadd.f32 0.0, %v711
    %v713 = vpop.f32.mrb[0].mxu0
    %v714 = vadd.f32 0.0, %v713
    %v715 = vpop.f32.mrb[0].mxu0
    %v716 = vadd.f32 0.0, %v715
    %717 = vmatprep.mubr.bf16.mxu0 0
    %718 = vmatmul.mubr.bf16.gmra.mrb[0].mxu0 %v392
    %v719 = vpop.f32.mrb[0].mxu0
    %v720 = vadd.f32 0.0, %v719
    %v721 = vpop.f32.mrb[0].mxu0
    %v722 = vadd.f32 0.0, %v721
    %v723 = vpop.f32.mrb[0].mxu0
    %v724 = vadd.f32 0.0, %v723
    %v725 = vpop.f32.mrb[0].mxu0
    %v726 = vadd.f32 0.0, %v725
    %727 = vmatprep.mubr.bf16.mxu0 0
    %728 = vmatmul.mubr.bf16.gmra.mrb[0].mxu0 %v393
    %v729 = vpop.f32.mrb[0].mxu0
    %v730 = vadd.f32 0.0, %v729
    %v731 = vpop.f32.mrb[0].mxu0
    %v732 = vadd.f32 0.0, %v731
    %v733 = vpop.f32.mrb[0].mxu0
    %v734 = vadd.f32 0.0, %v733
    %v735 = vpop.f32.mrb[0].mxu0
    %v736 = vadd.f32 0.0, %v735
    %737 = vmatprep.mubr.bf16.mxu0 0
    %738 = vmatmul.mubr.bf16.gmra.mrb[0].mxu0 %v394
    %v739 = vpop.f32.mrb[0].mxu0
    %v740 = vadd.f32 0.0, %v739
    %v741 = vpop.f32.mrb[0].mxu0
    %v742 = vadd.f32 0.0, %v741
    %v743 = vpop.f32.mrb[0].mxu0
    %v744 = vadd.f32 0.0, %v743
    %v745 = vpop.f32.mrb[0].mxu0
    %v746 = vadd.f32 0.0, %v745
    %747 = vdwg.mxu0
    %748 = vmatprep.subr.bf16.mxu0 0
    %749 = vmatpush1.bf16.msra.mxu0 %v509
    %750 = vmatprep.subr.bf16.mxu0 0
    %751 = vmatpush1.bf16.msra.mxu0 %v512
    %752 = vmatprep.subr.bf16.mxu0 0
    %753 = vmatpush1.bf16.msra.mxu0 %v515
    %754 = vmatprep.subr.bf16.mxu0 0
    %755 = vmatpush1.bf16.msra.mxu0 %v518
    %756 = vmatprep.subr.bf16.mxu0 0
    %757 = vmatpush1.bf16.msra.mxu0 %v521
    %758 = vmatprep.subr.bf16.mxu0 0
    %759 = vmatpush1.bf16.msra.mxu0 %v524
    %760 = vmatprep.subr.bf16.mxu0 0
    %761 = vmatpush1.bf16.msra.mxu0 %v527
    %762 = vmatprep.subr.bf16.mxu0 0
    %763 = vmatpush1.bf16.msra.mxu0 %v530
    %764 = vmatprep.subr.bf16.mxu0 0
    %765 = vmatpush1.bf16.msra.mxu0 0
    %766 = vmatprep.subr.bf16.mxu0 0
    %767 = vmatpush1.bf16.msra.mxu0 0
    %768 = vmatprep.subr.bf16.mxu0 0
    %769 = vmatpush1.bf16.msra.mxu0 0
    %770 = vmatprep.subr.bf16.mxu0 0
    %771 = vmatpush1.bf16.msra.mxu0 0
    %772 = vmatprep.subr.bf16.mxu0 0
    %773 = vmatpush1.bf16.msra.mxu0 0
    %774 = vmatprep.subr.bf16.mxu0 0
    %775 = vmatpush1.bf16.msra.mxu0 0
    %776 = vmatprep.subr.bf16.mxu0 0
    %777 = vmatpush1.bf16.msra.mxu0 0
    %778 = vmatprep.subr.bf16.mxu0 0
    %779 = vmatpush1.bf16.msra.mxu0 0
    %780 = vmatprep.mubr.bf16.mxu0 0
    %781 = vmatmul.mubr.bf16.gmra.mrb[0].mxu0 %v379
    %v782 = vpop.f32.mrb[0].mxu0
    %v783 = vadd.f32 0.0, %v782
    %v784 = vpop.f32.mrb[0].mxu0
    %v785 = vpop.f32.mrb[0].mxu0
    %v786 = vadd.f32 0.0, %v785
    %v787 = vpop.f32.mrb[0].mxu0
    %788 = vmatprep.mubr.bf16.mxu0 0
    %789 = vmatmul.mubr.bf16.gmra.mrb[0].mxu0 %v380
    %v790 = vpop.f32.mrb[0].mxu0
    %v791 = vadd.f32 0.0, %v790
    %v792 = vpop.f32.mrb[0].mxu0
    %v793 = vpop.f32.mrb[0].mxu0
    %v794 = vadd.f32 0.0, %v793
    %v795 = vpop.f32.mrb[0].mxu0
    %796 = vmatprep.mubr.bf16.mxu0 0
    %797 = vmatmul.mubr.bf16.gmra.mrb[0].mxu0 %v381
    %v798 = vpop.f32.mrb[0].mxu0
    %v799 = vadd.f32 0.0, %v798
    %v800 = vpop.f32.mrb[0].mxu0
    %v801 = vpop.f32.mrb[0].mxu0
    %v802 = vadd.f32 0.0, %v801
    %v803 = vpop.f32.mrb[0].mxu0
    %804 = vmatprep.mubr.bf16.mxu0 0
    %805 = vmatmul.mubr.bf16.gmra.mrb[0].mxu0 %v382
    %v806 = vpop.f32.mrb[0].mxu0
    %v807 = vadd.f32 0.0, %v806
    %v808 = vpop.f32.mrb[0].mxu0
    %v809 = vpop.f32.mrb[0].mxu0
    %v810 = vadd.f32 0.0, %v809
    %v811 = vpop.f32.mrb[0].mxu0
    %812 = vmatprep.mubr.bf16.mxu0 0
    %813 = vmatmul.mubr.bf16.gmra.mrb[0].mxu0 %v383
    %v814 = vpop.f32.mrb[0].mxu0
    %v815 = vadd.f32 0.0, %v814
    %v816 = vpop.f32.mrb[0].mxu0
    %v817 = vpop.f32.mrb[0].mxu0
    %v818 = vadd.f32 0.0, %v817
    %v819 = vpop.f32.mrb[0].mxu0
    %820 = vmatprep.mubr.bf16.mxu0 0
    %821 = vmatmul.mubr.bf16.gmra.mrb[0].mxu0 %v384
    %v822 = vpop.f32.mrb[0].mxu0
    %v823 = vadd.f32 0.0, %v822
    %v824 = vpop.f32.mrb[0].mxu0
    %v825 = vpop.f32.mrb[0].mxu0
    %v826 = vadd.f32 0.0, %v825
    %v827 = vpop.f32.mrb[0].mxu0
    %828 = vmatprep.mubr.bf16.mxu0 0
    %829 = vmatmul.mubr.bf16.gmra.mrb[0].mxu0 %v385
    %v830 = vpop.f32.mrb[0].mxu0
    %v831 = vadd.f32 0.0, %v830
    %v832 = vpop.f32.mrb[0].mxu0
    %v833 = vpop.f32.mrb[0].mxu0
    %v834 = vadd.f32 0.0, %v833
    %v835 = vpop.f32.mrb[0].mxu0
    %836 = vmatprep.mubr.bf16.mxu0 0
    %837 = vmatmul.mubr.bf16.gmra.mrb[0].mxu0 %v386
    %v838 = vpop.f32.mrb[0].mxu0
    %v839 = vadd.f32 0.0, %v838
    %v840 = vpop.f32.mrb[0].mxu0
    %v841 = vpop.f32.mrb[0].mxu0
    %v842 = vadd.f32 0.0, %v841
    %v843 = vpop.f32.mrb[0].mxu0
    %844 = vmatprep.mubr.bf16.mxu0 0
    %845 = vmatmul.mubr.bf16.gmra.mrb[0].mxu0 %v387
    %v846 = vpop.f32.mrb[0].mxu0
    %v847 = vadd.f32 0.0, %v846
    %v848 = vpop.f32.mrb[0].mxu0
    %v849 = vpop.f32.mrb[0].mxu0
    %v850 = vadd.f32 0.0, %v849
    %v851 = vpop.f32.mrb[0].mxu0
    %852 = vmatprep.mubr.bf16.mxu0 0
    %853 = vmatmul.mubr.bf16.gmra.mrb[0].mxu0 %v388
    %v854 = vpop.f32.mrb[0].mxu0
    %v855 = vadd.f32 0.0, %v854
    %v856 = vpop.f32.mrb[0].mxu0
    %v857 = vpop.f32.mrb[0].mxu0
    %v858 = vadd.f32 0.0, %v857
    %v859 = vpop.f32.mrb[0].mxu0
    %860 = vmatprep.mubr.bf16.mxu0 0
    %861 = vmatmul.mubr.bf16.gmra.mrb[0].mxu0 %v389
    %v862 = vpop.f32.mrb[0].mxu0
    %v863 = vadd.f32 0.0, %v862
    %v864 = vpop.f32.mrb[0].mxu0
    %v865 = vpop.f32.mrb[0].mxu0
    %v866 = vadd.f32 0.0, %v865
    %v867 = vpop.f32.mrb[0].mxu0
    %868 = vmatprep.mubr.bf16.mxu0 0
    %869 = vmatmul.mubr.bf16.gmra.mrb[0].mxu0 %v390
    %v870 = vpop.f32.mrb[0].mxu0
    %v871 = vadd.f32 0.0, %v870
    %v872 = vpop.f32.mrb[0].mxu0
    %v873 = vpop.f32.mrb[0].mxu0
    %v874 = vadd.f32 0.0, %v873
    %v875 = vpop.f32.mrb[0].mxu0
    %876 = vmatprep.mubr.bf16.mxu0 0
    %877 = vmatmul.mubr.bf16.gmra.mrb[0].mxu0 %v391
    %v878 = vpop.f32.mrb[0].mxu0
    %v879 = vadd.f32 0.0, %v878
    %v880 = vpop.f32.mrb[0].mxu0
    %v881 = vpop.f32.mrb[0].mxu0
    %v882 = vadd.f32 0.0, %v881
    %v883 = vpop.f32.mrb[0].mxu0
    %884 = vmatprep.mubr.bf16.mxu0 0
    %885 = vmatmul.mubr.bf16.gmra.mrb[0].mxu0 %v392
    %v886 = vpop.f32.mrb[0].mxu0
    %v887 = vadd.f32 0.0, %v886
    %v888 = vpop.f32.mrb[0].mxu0
    %v889 = vpop.f32.mrb[0].mxu0
    %v890 = vadd.f32 0.0, %v889
    %v891 = vpop.f32.mrb[0].mxu0
    %892 = vmatprep.mubr.bf16.mxu0 0
    %893 = vmatmul.mubr.bf16.gmra.mrb[0].mxu0 %v393
    %v894 = vpop.f32.mrb[0].mxu0
    %v895 = vadd.f32 0.0, %v894
    %v896 = vpop.f32.mrb[0].mxu0
    %v897 = vpop.f32.mrb[0].mxu0
    %v898 = vadd.f32 0.0, %v897
    %v899 = vpop.f32.mrb[0].mxu0
    %900 = vmatprep.mubr.bf16.mxu0 0
    %901 = vmatmul.mubr.bf16.gmra.mrb[0].mxu0 %v394
    %v902 = vpop.f32.mrb[0].mxu0
    %v903 = vadd.f32 0.0, %v902
    %v904 = vpop.f32.mrb[0].mxu0
    %v905 = vpop.f32.mrb[0].mxu0
    %v906 = vadd.f32 0.0, %v905
    %v907 = vpop.f32.mrb[0].mxu0
    %908 = vdwg.mxu0
    %v909 = vmul.f32 %v90, %v90
    %v910 = vmul.f32 %v91, %v91
    %v911 = vmul.f32 %v92, %v92
    %v912 = vmul.f32 %v93, %v93
    %v913 = vmul.f32 %v94, %v94
    %v914 = vmul.f32 %v95, %v95
    %v915 = vmul.f32 %v96, %v96
    %v916 = vmul.f32 %v97, %v97
    %v917 = vmul.f32 %v98, %v98
    %v918 = vmul.f32 %v99, %v99
    %v919 = vmul.f32 %v100, %v100
    %v920 = vmul.f32 %v101, %v101
    %v921 = vmul.f32 %v102, %v102
    %v922 = vmul.f32 %v103, %v103
    %v923 = vmul.f32 %v104, %v104
    %v924 = vmul.f32 %v105, %v105
    %v925 = vmul.f32 %v106, %v106
    %v926 = vmul.f32 %v107, %v107
    %v927 = vmul.f32 %v108, %v108
    %v928 = vmul.f32 %v109, %v109
    %v929 = vmul.f32 %v110, %v110
    %v930 = vmul.f32 %v111, %v111
    %v931 = vmul.f32 %v112, %v112
    %v932 = vmul.f32 %v113, %v113
    %v933 = vmul.f32 %v114, %v114
    %v934 = vmul.f32 %v115, %v115
    %v935 = vmul.f32 %v116, %v116
    %v936 = vmul.f32 %v117, %v117
    %v937 = vmul.f32 %v118, %v118
    %v938 = vmul.f32 %v119, %v119
    %v939 = vmul.f32 %v120, %v120
    %v940 = vmul.f32 %v121, %v121
    %941 = vadd.xlane.f32.xlu0 %v909
    %v942 = vpop.xlane.xlu0 %941
    %943 = vadd.xlane.f32.xlu0 %v910
    %v944 = vpop.xlane.xlu0 %943
    %945 = vadd.xlane.f32.xlu0 %v911
    %v946 = vpop.xlane.xlu0 %945
    %947 = vadd.xlane.f32.xlu0 %v912
    %v948 = vpop.xlane.xlu0 %947
    %949 = vadd.xlane.f32.xlu0 %v913
    %v950 = vpop.xlane.xlu0 %949
    %951 = vadd.xlane.f32.xlu0 %v914
    %v952 = vpop.xlane.xlu0 %951
    %953 = vadd.xlane.f32.xlu0 %v915
    %v954 = vpop.xlane.xlu0 %953
    %955 = vadd.xlane.f32.xlu0 %v916
    %v956 = vpop.xlane.xlu0 %955
    %957 = vadd.xlane.f32.xlu0 %v917
    %v958 = vpop.xlane.xlu0 %957
    %959 = vadd.xlane.f32.xlu0 %v918
    %v960 = vpop.xlane.xlu0 %959
    %961 = vadd.xlane.f32.xlu0 %v919
    %v962 = vpop.xlane.xlu0 %961
    %963 = vadd.xlane.f32.xlu0 %v920
    %v964 = vpop.xlane.xlu0 %963
    %965 = vadd.xlane.f32.xlu0 %v921
    %v966 = vpop.xlane.xlu0 %965
    %967 = vadd.xlane.f32.xlu0 %v922
    %v968 = vpop.xlane.xlu0 %967
    %969 = vadd.xlane.f32.xlu0 %v923
    %v970 = vpop.xlane.xlu0 %969
    %971 = vadd.xlane.f32.xlu0 %v924
    %v972 = vpop.xlane.xlu0 %971
    %973 = vadd.xlane.f32.xlu0 %v925
    %v974 = vpop.xlane.xlu0 %973
    %975 = vadd.xlane.f32.xlu0 %v926
    %v976 = vpop.xlane.xlu0 %975
    %977 = vadd.xlane.f32.xlu0 %v927
    %v978 = vpop.xlane.xlu0 %977
    %979 = vadd.xlane.f32.xlu0 %v928
    %v980 = vpop.xlane.xlu0 %979
    %981 = vadd.xlane.f32.xlu0 %v929
    %v982 = vpop.xlane.xlu0 %981
    %983 = vadd.xlane.f32.xlu0 %v930
    %v984 = vpop.xlane.xlu0 %983
    %985 = vadd.xlane.f32.xlu0 %v931
    %v986 = vpop.xlane.xlu0 %985
    %987 = vadd.xlane.f32.xlu0 %v932
    %v988 = vpop.xlane.xlu0 %987
    %989 = vadd.xlane.f32.xlu0 %v933
    %v990 = vpop.xlane.xlu0 %989
    %991 = vadd.xlane.f32.xlu0 %v934
    %v992 = vpop.xlane.xlu0 %991
    %993 = vadd.xlane.f32.xlu0 %v935
    %v994 = vpop.xlane.xlu0 %993
    %995 = vadd.xlane.f32.xlu0 %v936
    %v996 = vpop.xlane.xlu0 %995
    %997 = vadd.xlane.f32.xlu0 %v937
    %v998 = vpop.xlane.xlu0 %997
    %999 = vadd.xlane.f32.xlu0 %v938
    %v1000 = vpop.xlane.xlu0 %999
    %1001 = vadd.xlane.f32.xlu0 %v939
    %v1002 = vpop.xlane.xlu0 %1001
    %1003 = vadd.xlane.f32.xlu0 %v940
    %v1004 = vpop.xlane.xlu0 %1003
    %v1005 = vmul.f32 %v942, %v250
    %v1006 = vmul.f32 %v944, %v250
    %v1007 = vmul.f32 %v946, %v250
    %v1008 = vmul.f32 %v948, %v250
    %v1009 = vmul.f32 %v950, %v250
    %v1010 = vmul.f32 %v952, %v250
    %v1011 = vmul.f32 %v954, %v250
    %v1012 = vmul.f32 %v956, %v250
    %v1013 = vmul.f32 %v958, %v250
    %v1014 = vmul.f32 %v960, %v250
    %v1015 = vmul.f32 %v962, %v250
    %v1016 = vmul.f32 %v964, %v250
    %v1017 = vmul.f32 %v966, %v250
    %v1018 = vmul.f32 %v968, %v250
    %v1019 = vmul.f32 %v970, %v250
    %v1020 = vmul.f32 %v972, %v250
    %v1021 = vmul.f32 %v974, %v250
    %v1022 = vmul.f32 %v976, %v250
    %v1023 = vmul.f32 %v978, %v250
    %v1024 = vmul.f32 %v980, %v250
    %v1025 = vmul.f32 %v982, %v250
    %v1026 = vmul.f32 %v984, %v250
    %v1027 = vmul.f32 %v986, %v250
    %v1028 = vmul.f32 %v988, %v250
    %v1029 = vmul.f32 %v990, %v250
    %v1030 = vmul.f32 %v992, %v250
    %v1031 = vmul.f32 %v994, %v250
    %v1032 = vmul.f32 %v996, %v250
    %v1033 = vmul.f32 %v998, %v250
    %v1034 = vmul.f32 %v1000, %v250
    %v1035 = vmul.f32 %v1002, %v250
    %v1036 = vmul.f32 %v1004, %v250
    %v1037 = vadd.f32 %v1005, 1e-06
    %v1038 = vadd.f32 %v1006, 1e-06
    %v1039 = vadd.f32 %v1007, 1e-06
    %v1040 = vadd.f32 %v1008, 1e-06
    %v1041 = vadd.f32 %v1009, 1e-06
    %v1042 = vadd.f32 %v1010, 1e-06
    %v1043 = vadd.f32 %v1011, 1e-06
    %v1044 = vadd.f32 %v1012, 1e-06
    %v1045 = vadd.f32 %v1013, 1e-06
    %v1046 = vadd.f32 %v1014, 1e-06
    %v1047 = vadd.f32 %v1015, 1e-06
    %v1048 = vadd.f32 %v1016, 1e-06
    %v1049 = vadd.f32 %v1017, 1e-06
    %v1050 = vadd.f32 %v1018, 1e-06
    %v1051 = vadd.f32 %v1019, 1e-06
    %v1052 = vadd.f32 %v1020, 1e-06
    %v1053 = vadd.f32 %v1021, 1e-06
    %v1054 = vadd.f32 %v1022, 1e-06
    %v1055 = vadd.f32 %v1023, 1e-06
    %v1056 = vadd.f32 %v1024, 1e-06
    %v1057 = vadd.f32 %v1025, 1e-06
    %v1058 = vadd.f32 %v1026, 1e-06
    %v1059 = vadd.f32 %v1027, 1e-06
    %v1060 = vadd.f32 %v1028, 1e-06
    %v1061 = vadd.f32 %v1029, 1e-06
    %v1062 = vadd.f32 %v1030, 1e-06
    %v1063 = vadd.f32 %v1031, 1e-06
    %v1064 = vadd.f32 %v1032, 1e-06
    %v1065 = vadd.f32 %v1033, 1e-06
    %v1066 = vadd.f32 %v1034, 1e-06
    %v1067 = vadd.f32 %v1035, 1e-06
    %v1068 = vadd.f32 %v1036, 1e-06
    %v1069 = vrsqrt.pop %v1037
    %v1070 = vrsqrt.pop %v1038
    %v1071 = vrsqrt.pop %v1039
    %v1072 = vrsqrt.pop %v1040
    %v1073 = vrsqrt.pop %v1041
    %v1074 = vrsqrt.pop %v1042
    %v1075 = vrsqrt.pop %v1043
    %v1076 = vrsqrt.pop %v1044
    %v1077 = vrsqrt.pop %v1045
    %v1078 = vrsqrt.pop %v1046
    %v1079 = vrsqrt.pop %v1047
    %v1080 = vrsqrt.pop %v1048
    %v1081 = vrsqrt.pop %v1049
    %v1082 = vrsqrt.pop %v1050
    %v1083 = vrsqrt.pop %v1051
    %v1084 = vrsqrt.pop %v1052
    %v1085 = vrsqrt.pop %v1053
    %v1086 = vrsqrt.pop %v1054
    %v1087 = vrsqrt.pop %v1055
    %v1088 = vrsqrt.pop %v1056
    %v1089 = vrsqrt.pop %v1057
    %v1090 = vrsqrt.pop %v1058
    %v1091 = vrsqrt.pop %v1059
    %v1092 = vrsqrt.pop %v1060
    %v1093 = vrsqrt.pop %v1061
    %v1094 = vrsqrt.pop %v1062
    %v1095 = vrsqrt.pop %v1063
    %v1096 = vrsqrt.pop %v1064
    %v1097 = vrsqrt.pop %v1065
    %v1098 = vrsqrt.pop %v1066
    %v1099 = vrsqrt.pop %v1067
    %v1100 = vrsqrt.pop %v1068
    %v1101 = vmul.f32 %v90, %v1069
    %v1102 = vmul.f32 %v91, %v1070
    %v1103 = vmul.f32 %v92, %v1071
    %v1104 = vmul.f32 %v93, %v1072
    %v1105 = vmul.f32 %v94, %v1073
    %v1106 = vmul.f32 %v95, %v1074
    %v1107 = vmul.f32 %v96, %v1075
    %v1108 = vmul.f32 %v97, %v1076
    %v1109 = vmul.f32 %v98, %v1077
    %v1110 = vmul.f32 %v99, %v1078
    %v1111 = vmul.f32 %v100, %v1079
    %v1112 = vmul.f32 %v101, %v1080
    %v1113 = vmul.f32 %v102, %v1081
    %v1114 = vmul.f32 %v103, %v1082
    %v1115 = vmul.f32 %v104, %v1083
    %v1116 = vmul.f32 %v105, %v1084
    %v1117 = vmul.f32 %v106, %v1085
    %v1118 = vmul.f32 %v107, %v1086
    %v1119 = vmul.f32 %v108, %v1087
    %v1120 = vmul.f32 %v109, %v1088
    %v1121 = vmul.f32 %v110, %v1089
    %v1122 = vmul.f32 %v111, %v1090
    %v1123 = vmul.f32 %v112, %v1091
    %v1124 = vmul.f32 %v113, %v1092
    %v1125 = vmul.f32 %v114, %v1093
    %v1126 = vmul.f32 %v115, %v1094
    %v1127 = vmul.f32 %v116, %v1095
    %v1128 = vmul.f32 %v117, %v1096
    %v1129 = vmul.f32 %v118, %v1097
    %v1130 = vmul.f32 %v119, %v1098
    %v1131 = vmul.f32 %v120, %v1099
    %v1132 = vmul.f32 %v121, %v1100
    %v1133 = vadd.f32 %v590, 1.0
    %v1134 = vadd.f32 %v594, 1.0
    %v1135 = vadd.f32 %v600, 1.0
    %v1136 = vadd.f32 %v604, 1.0
    %v1137 = vadd.f32 %v610, 1.0
    %v1138 = vadd.f32 %v614, 1.0
    %v1139 = vadd.f32 %v620, 1.0
    %v1140 = vadd.f32 %v624, 1.0
    %v1141 = vadd.f32 %v630, 1.0
    %v1142 = vadd.f32 %v634, 1.0
    %v1143 = vadd.f32 %v640, 1.0
    %v1144 = vadd.f32 %v644, 1.0
    %v1145 = vadd.f32 %v650, 1.0
    %v1146 = vadd.f32 %v654, 1.0
    %v1147 = vadd.f32 %v660, 1.0
    %v1148 = vadd.f32 %v664, 1.0
    %v1149 = vadd.f32 %v670, 1.0
    %v1150 = vadd.f32 %v674, 1.0
    %v1151 = vadd.f32 %v680, 1.0
    %v1152 = vadd.f32 %v684, 1.0
    %v1153 = vadd.f32 %v690, 1.0
    %v1154 = vadd.f32 %v694, 1.0
    %v1155 = vadd.f32 %v700, 1.0
    %v1156 = vadd.f32 %v704, 1.0
    %v1157 = vadd.f32 %v710, 1.0
    %v1158 = vadd.f32 %v714, 1.0
    %v1159 = vadd.f32 %v720, 1.0
    %v1160 = vadd.f32 %v724, 1.0
    %v1161 = vadd.f32 %v730, 1.0
    %v1162 = vadd.f32 %v734, 1.0
    %v1163 = vadd.f32 %v740, 1.0
    %v1164 = vadd.f32 %v744, 1.0
    %v1165 = vmul.f32 %v1101, %v1133
    %v1166 = vmul.f32 %v1102, %v1134
    %v1167 = vmul.f32 %v1103, %v1135
    %v1168 = vmul.f32 %v1104, %v1136
    %v1169 = vmul.f32 %v1105, %v1137
    %v1170 = vmul.f32 %v1106, %v1138
    %v1171 = vmul.f32 %v1107, %v1139
    %v1172 = vmul.f32 %v1108, %v1140
    %v1173 = vmul.f32 %v1109, %v1141
    %v1174 = vmul.f32 %v1110, %v1142
    %v1175 = vmul.f32 %v1111, %v1143
    %v1176 = vmul.f32 %v1112, %v1144
    %v1177 = vmul.f32 %v1113, %v1145
    %v1178 = vmul.f32 %v1114, %v1146
    %v1179 = vmul.f32 %v1115, %v1147
    %v1180 = vmul.f32 %v1116, %v1148
    %v1181 = vmul.f32 %v1117, %v1149
    %v1182 = vmul.f32 %v1118, %v1150
    %v1183 = vmul.f32 %v1119, %v1151
    %v1184 = vmul.f32 %v1120, %v1152
    %v1185 = vmul.f32 %v1121, %v1153
    %v1186 = vmul.f32 %v1122, %v1154
    %v1187 = vmul.f32 %v1123, %v1155
    %v1188 = vmul.f32 %v1124, %v1156
    %v1189 = vmul.f32 %v1125, %v1157
    %v1190 = vmul.f32 %v1126, %v1158
    %v1191 = vmul.f32 %v1127, %v1159
    %v1192 = vmul.f32 %v1128, %v1160
    %v1193 = vmul.f32 %v1129, %v1161
    %v1194 = vmul.f32 %v1130, %v1162
    %v1195 = vmul.f32 %v1131, %v1163
    %v1196 = vmul.f32 %v1132, %v1164
    %v1197 = vadd.f32 %v1165, %v592
    %v1198 = vadd.f32 %v1166, %v596
    %v1199 = vadd.f32 %v1167, %v602
    %v1200 = vadd.f32 %v1168, %v606
    %v1201 = vadd.f32 %v1169, %v612
    %v1202 = vadd.f32 %v1170, %v616
    %v1203 = vadd.f32 %v1171, %v622
    %v1204 = vadd.f32 %v1172, %v626
    %v1205 = vadd.f32 %v1173, %v632
    %v1206 = vadd.f32 %v1174, %v636
    %v1207 = vadd.f32 %v1175, %v642
    %v1208 = vadd.f32 %v1176, %v646
    %v1209 = vadd.f32 %v1177, %v652
    %v1210 = vadd.f32 %v1178, %v656
    %v1211 = vadd.f32 %v1179, %v662
    %v1212 = vadd.f32 %v1180, %v666
    %v1213 = vadd.f32 %v1181, %v672
    %v1214 = vadd.f32 %v1182, %v676
    %v1215 = vadd.f32 %v1183, %v682
    %v1216 = vadd.f32 %v1184, %v686
    %v1217 = vadd.f32 %v1185, %v692
    %v1218 = vadd.f32 %v1186, %v696
    %v1219 = vadd.f32 %v1187, %v702
    %v1220 = vadd.f32 %v1188, %v706
    %v1221 = vadd.f32 %v1189, %v712
    %v1222 = vadd.f32 %v1190, %v716
    %v1223 = vadd.f32 %v1191, %v722
    %v1224 = vadd.f32 %v1192, %v726
    %v1225 = vadd.f32 %v1193, %v732
    %v1226 = vadd.f32 %v1194, %v736
    %v1227 = vadd.f32 %v1195, %v742
    %v1228 = vadd.f32 %v1196, %v746
    %v1229 = vpack.c.bf16 %v1198, %v1197
    %v1230 = vpack.c.bf16 %v1200, %v1199
    %v1231 = vpack.c.bf16 %v1202, %v1201
    %v1232 = vpack.c.bf16 %v1204, %v1203
    %v1233 = vpack.c.bf16 %v1206, %v1205
    %v1234 = vpack.c.bf16 %v1208, %v1207
    %v1235 = vpack.c.bf16 %v1210, %v1209
    %v1236 = vpack.c.bf16 %v1212, %v1211
    %v1237 = vpack.c.bf16 %v1214, %v1213
    %v1238 = vpack.c.bf16 %v1216, %v1215
    %v1239 = vpack.c.bf16 %v1218, %v1217
    %v1240 = vpack.c.bf16 %v1220, %v1219
    %v1241 = vpack.c.bf16 %v1222, %v1221
    %v1242 = vpack.c.bf16 %v1224, %v1223
    %v1243 = vpack.c.bf16 %v1226, %v1225
    %v1244 = vpack.c.bf16 %v1228, %v1227
    %v1245 = vld [vmem:[#allocation8] sm:$0xff]
    %v1246 = vld [vmem:[#allocation8 + $0x8] sm:$0xff]
    %v1247 = vld [vmem:[#allocation8 + $0x10] sm:$0xff]
    %v1248 = vld [vmem:[#allocation8 + $0x18] sm:$0xff]
    %v1249 = vld [vmem:[#allocation8 + $0x20] sm:$0xff]
    %v1250 = vld [vmem:[#allocation8 + $0x28] sm:$0xff]
    %v1251 = vld [vmem:[#allocation8 + $0x30] sm:$0xff]
    %v1252 = vld [vmem:[#allocation8 + $0x38] sm:$0xff]
    %v1253 = vld [vmem:[#allocation8 + $0x40] sm:$0xff]
    %v1254 = vld [vmem:[#allocation8 + $0x48] sm:$0xff]
    %v1255 = vld [vmem:[#allocation8 + $0x50] sm:$0xff]
    %v1256 = vld [vmem:[#allocation8 + $0x58] sm:$0xff]
    %v1257 = vld [vmem:[#allocation8 + $0x60] sm:$0xff]
    %v1258 = vld [vmem:[#allocation8 + $0x68] sm:$0xff]
    %v1259 = vld [vmem:[#allocation8 + $0x70] sm:$0xff]
    %v1260 = vld [vmem:[#allocation8 + $0x78] sm:$0xff]
    %v1277 = vunpack.c.l.b16 %v1245
    %v1278 = vunpack.c.h.b16 %v1245
    %v1279 = vunpack.c.l.b16 %v1246
    %v1280 = vunpack.c.h.b16 %v1246
    %v1281 = vunpack.c.l.b16 %v1247
    %v1282 = vunpack.c.h.b16 %v1247
    %v1283 = vunpack.c.l.b16 %v1248
    %v1284 = vunpack.c.h.b16 %v1248
    %v1285 = vunpack.c.l.b16 %v1249
    %v1286 = vunpack.c.h.b16 %v1249
    %v1287 = vunpack.c.l.b16 %v1250
    %v1288 = vunpack.c.h.b16 %v1250
    %v1289 = vunpack.c.l.b16 %v1251
    %v1290 = vunpack.c.h.b16 %v1251
    %v1291 = vunpack.c.l.b16 %v1252
    %v1292 = vunpack.c.h.b16 %v1252
    %v1293 = vunpack.c.l.b16 %v1253
    %v1294 = vunpack.c.h.b16 %v1253
    %v1295 = vunpack.c.l.b16 %v1254
    %v1296 = vunpack.c.h.b16 %v1254
    %v1297 = vunpack.c.l.b16 %v1255
    %v1298 = vunpack.c.h.b16 %v1255
    %v1299 = vunpack.c.l.b16 %v1256
    %v1300 = vunpack.c.h.b16 %v1256
    %v1301 = vunpack.c.l.b16 %v1257
    %v1302 = vunpack.c.h.b16 %v1257
    %v1303 = vunpack.c.l.b16 %v1258
    %v1304 = vunpack.c.h.b16 %v1258
    %v1305 = vunpack.c.l.b16 %v1259
    %v1306 = vunpack.c.h.b16 %v1259
    %v1307 = vunpack.c.l.b16 %v1260
    %v1308 = vunpack.c.h.b16 %v1260
    %v1309 = vpack.c.b16 %v1279, %v1277
    %v1310 = vpack.c.b16 %v1280, %v1278
    %v1311 = vpack.c.b16 %v1283, %v1281
    %v1312 = vpack.c.b16 %v1284, %v1282
    %v1313 = vpack.c.b16 %v1287, %v1285
    %v1314 = vpack.c.b16 %v1288, %v1286
    %v1315 = vpack.c.b16 %v1291, %v1289
    %v1316 = vpack.c.b16 %v1292, %v1290
    %v1317 = vpack.c.b16 %v1295, %v1293
    %v1318 = vpack.c.b16 %v1296, %v1294
    %v1319 = vpack.c.b16 %v1299, %v1297
    %v1320 = vpack.c.b16 %v1300, %v1298
    %v1321 = vpack.c.b16 %v1303, %v1301
    %v1322 = vpack.c.b16 %v1304, %v1302
    %v1323 = vpack.c.b16 %v1307, %v1305
    %v1324 = vpack.c.b16 %v1308, %v1306
    %1341 = vmatprep.subr.bf16.mxu0 %v1310
    %1342 = vmatpush1.bf16.msra.mxu0 %v1309
    %1343 = vmatprep.subr.bf16.mxu0 %v1312
    %1344 = vmatpush1.bf16.msra.mxu0 %v1311
    %1345 = vmatprep.subr.bf16.mxu0 %v1314
    %1346 = vmatpush1.bf16.msra.mxu0 %v1313
    %1347 = vmatprep.subr.bf16.mxu0 %v1316
    %1348 = vmatpush1.bf16.msra.mxu0 %v1315
    %1349 = vmatprep.subr.bf16.mxu0 %v1318
    %1350 = vmatpush1.bf16.msra.mxu0 %v1317
    %1351 = vmatprep.subr.bf16.mxu0 %v1320
    %1352 = vmatpush1.bf16.msra.mxu0 %v1319
    %1353 = vmatprep.subr.bf16.mxu0 %v1322
    %1354 = vmatpush1.bf16.msra.mxu0 %v1321
    %1355 = vmatprep.subr.bf16.mxu0 %v1324
    %1356 = vmatpush1.bf16.msra.mxu0 %v1323
    %1357 = vmatprep.subr.bf16.mxu0 0
    %1358 = vmatpush1.bf16.msra.mxu0 0
    %1359 = vmatprep.subr.bf16.mxu0 0
    %1360 = vmatpush1.bf16.msra.mxu0 0
    %1361 = vmatprep.subr.bf16.mxu0 0
    %1362 = vmatpush1.bf16.msra.mxu0 0
    %1363 = vmatprep.subr.bf16.mxu0 0
    %1364 = vmatpush1.bf16.msra.mxu0 0
    %1365 = vmatprep.subr.bf16.mxu0 0
    %1366 = vmatpush1.bf16.msra.mxu0 0
    %1367 = vmatprep.subr.bf16.mxu0 0
    %1368 = vmatpush1.bf16.msra.mxu0 0
    %1369 = vmatprep.subr.bf16.mxu0 0
    %1370 = vmatpush1.bf16.msra.mxu0 0
    %1371 = vmatprep.subr.bf16.mxu0 0
    %1372 = vmatpush1.bf16.msra.mxu0 0
    %1373 = vmatprep.mubr.bf16.mxu0 0
    %1374 = vmatmul.mubr.bf16.gmra.mrb[0].mxu0 %v1229
    %v1375 = vpop.f32.mrb[0].mxu0
    %v1376 = vadd.f32 0.0, %v1375
    %v1377 = vpop.f32.mrb[0].mxu0
    %v1378 = vadd.f32 0.0, %v1377
    %v1379 = vpop.f32.mrb[0].mxu0
    %v1380 = vadd.f32 0.0, %v1379
    %v1381 = vpop.f32.mrb[0].mxu0
    %v1382 = vadd.f32 0.0, %v1381
    %1383 = vmatprep.mubr.bf16.mxu0 0
    %1384 = vmatmul.mubr.bf16.gmra.mrb[0].mxu0 %v1230
    %v1385 = vpop.f32.mrb[0].mxu0
    %v1386 = vadd.f32 0.0, %v1385
    %v1387 = vpop.f32.mrb[0].mxu0
    %v1388 = vadd.f32 0.0, %v1387
    %v1389 = vpop.f32.mrb[0].mxu0
    %v1390 = vadd.f32 0.0, %v1389
    %v1391 = vpop.f32.mrb[0].mxu0
    %v1392 = vadd.f32 0.0, %v1391
    %1393 = vmatprep.mubr.bf16.mxu0 0
    %1394 = vmatmul.mubr.bf16.gmra.mrb[0].mxu0 %v1231
    %v1395 = vpop.f32.mrb[0].mxu0
    %v1396 = vadd.f32 0.0, %v1395
    %v1397 = vpop.f32.mrb[0].mxu0
    %v1398 = vadd.f32 0.0, %v1397
    %v1399 = vpop.f32.mrb[0].mxu0
    %v1400 = vadd.f32 0.0, %v1399
    %v1401 = vpop.f32.mrb[0].mxu0
    %v1402 = vadd.f32 0.0, %v1401
    %1403 = vmatprep.mubr.bf16.mxu0 0
    %1404 = vmatmul.mubr.bf16.gmra.mrb[0].mxu0 %v1232
    %v1405 = vpop.f32.mrb[0].mxu0
    %v1406 = vadd.f32 0.0, %v1405
    %v1407 = vpop.f32.mrb[0].mxu0
    %v1408 = vadd.f32 0.0, %v1407
    %v1409 = vpop.f32.mrb[0].mxu0
    %v1410 = vadd.f32 0.0, %v1409
    %v1411 = vpop.f32.mrb[0].mxu0
    %v1412 = vadd.f32 0.0, %v1411
    %1413 = vmatprep.mubr.bf16.mxu0 0
    %1414 = vmatmul.mubr.bf16.gmra.mrb[0].mxu0 %v1233
    %v1415 = vpop.f32.mrb[0].mxu0
    %v1416 = vadd.f32 0.0, %v1415
    %v1417 = vpop.f32.mrb[0].mxu0
    %v1418 = vadd.f32 0.0, %v1417
    %v1419 = vpop.f32.mrb[0].mxu0
    %v1420 = vadd.f32 0.0, %v1419
    %v1421 = vpop.f32.mrb[0].mxu0
    %v1422 = vadd.f32 0.0, %v1421
    %1423 = vmatprep.mubr.bf16.mxu0 0
    %1424 = vmatmul.mubr.bf16.gmra.mrb[0].mxu0 %v1234
    %v1425 = vpop.f32.mrb[0].mxu0
    %v1426 = vadd.f32 0.0, %v1425
    %v1427 = vpop.f32.mrb[0].mxu0
    %v1428 = vadd.f32 0.0, %v1427
    %v1429 = vpop.f32.mrb[0].mxu0
    %v1430 = vadd.f32 0.0, %v1429
    %v1431 = vpop.f32.mrb[0].mxu0
    %v1432 = vadd.f32 0.0, %v1431
    %1433 = vmatprep.mubr.bf16.mxu0 0
    %1434 = vmatmul.mubr.bf16.gmra.mrb[0].mxu0 %v1235
    %v1435 = vpop.f32.mrb[0].mxu0
    %v1436 = vadd.f32 0.0, %v1435
    %v1437 = vpop.f32.mrb[0].mxu0
    %v1438 = vadd.f32 0.0, %v1437
    %v1439 = vpop.f32.mrb[0].mxu0
    %v1440 = vadd.f32 0.0, %v1439
    %v1441 = vpop.f32.mrb[0].mxu0
    %v1442 = vadd.f32 0.0, %v1441
    %1443 = vmatprep.mubr.bf16.mxu0 0
    %1444 = vmatmul.mubr.bf16.gmra.mrb[0].mxu0 %v1236
    %v1445 = vpop.f32.mrb[0].mxu0
    %v1446 = vadd.f32 0.0, %v1445
    %v1447 = vpop.f32.mrb[0].mxu0
    %v1448 = vadd.f32 0.0, %v1447
    %v1449 = vpop.f32.mrb[0].mxu0
    %v1450 = vadd.f32 0.0, %v1449
    %v1451 = vpop.f32.mrb[0].mxu0
    %v1452 = vadd.f32 0.0, %v1451
    %1453 = vmatprep.mubr.bf16.mxu0 0
    %1454 = vmatmul.mubr.bf16.gmra.mrb[0].mxu0 %v1237
    %v1455 = vpop.f32.mrb[0].mxu0
    %v1456 = vadd.f32 0.0, %v1455
    %v1457 = vpop.f32.mrb[0].mxu0
    %v1458 = vadd.f32 0.0, %v1457
    %v1459 = vpop.f32.mrb[0].mxu0
    %v1460 = vadd.f32 0.0, %v1459
    %v1461 = vpop.f32.mrb[0].mxu0
    %v1462 = vadd.f32 0.0, %v1461
    %1463 = vmatprep.mubr.bf16.mxu0 0
    %1464 = vmatmul.mubr.bf16.gmra.mrb[0].mxu0 %v1238
    %v1465 = vpop.f32.mrb[0].mxu0
    %v1466 = vadd.f32 0.0, %v1465
    %v1467 = vpop.f32.mrb[0].mxu0
    %v1468 = vadd.f32 0.0, %v1467
    %v1469 = vpop.f32.mrb[0].mxu0
    %v1470 = vadd.f32 0.0, %v1469
    %v1471 = vpop.f32.mrb[0].mxu0
    %v1472 = vadd.f32 0.0, %v1471
    %1473 = vmatprep.mubr.bf16.mxu0 0
    %1474 = vmatmul.mubr.bf16.gmra.mrb[0].mxu0 %v1239
    %v1475 = vpop.f32.mrb[0].mxu0
    %v1476 = vadd.f32 0.0, %v1475
    %v1477 = vpop.f32.mrb[0].mxu0
    %v1478 = vadd.f32 0.0, %v1477
    %v1479 = vpop.f32.mrb[0].mxu0
    %v1480 = vadd.f32 0.0, %v1479
    %v1481 = vpop.f32.mrb[0].mxu0
    %v1482 = vadd.f32 0.0, %v1481
    %1483 = vmatprep.mubr.bf16.mxu0 0
    %1484 = vmatmul.mubr.bf16.gmra.mrb[0].mxu0 %v1240
    %v1485 = vpop.f32.mrb[0].mxu0
    %v1486 = vadd.f32 0.0, %v1485
    %v1487 = vpop.f32.mrb[0].mxu0
    %v1488 = vadd.f32 0.0, %v1487
    %v1489 = vpop.f32.mrb[0].mxu0
    %v1490 = vadd.f32 0.0, %v1489
    %v1491 = vpop.f32.mrb[0].mxu0
    %v1492 = vadd.f32 0.0, %v1491
    %1493 = vmatprep.mubr.bf16.mxu0 0
    %1494 = vmatmul.mubr.bf16.gmra.mrb[0].mxu0 %v1241
    %v1495 = vpop.f32.mrb[0].mxu0
    %v1496 = vadd.f32 0.0, %v1495
    %v1497 = vpop.f32.mrb[0].mxu0
    %v1498 = vadd.f32 0.0, %v1497
    %v1499 = vpop.f32.mrb[0].mxu0
    %v1500 = vadd.f32 0.0, %v1499
    %v1501 = vpop.f32.mrb[0].mxu0
    %v1502 = vadd.f32 0.0, %v1501
    %1503 = vmatprep.mubr.bf16.mxu0 0
    %1504 = vmatmul.mubr.bf16.gmra.mrb[0].mxu0 %v1242
    %v1505 = vpop.f32.mrb[0].mxu0
    %v1506 = vadd.f32 0.0, %v1505
    %v1507 = vpop.f32.mrb[0].mxu0
    %v1508 = vadd.f32 0.0, %v1507
    %v1509 = vpop.f32.mrb[0].mxu0
    %v1510 = vadd.f32 0.0, %v1509
    %v1511 = vpop.f32.mrb[0].mxu0
    %v1512 = vadd.f32 0.0, %v1511
    %1513 = vmatprep.mubr.bf16.mxu0 0
    %1514 = vmatmul.mubr.bf16.gmra.mrb[0].mxu0 %v1243
    %v1515 = vpop.f32.mrb[0].mxu0
    %v1516 = vadd.f32 0.0, %v1515
    %v1517 = vpop.f32.mrb[0].mxu0
    %v1518 = vadd.f32 0.0, %v1517
    %v1519 = vpop.f32.mrb[0].mxu0
    %v1520 = vadd.f32 0.0, %v1519
    %v1521 = vpop.f32.mrb[0].mxu0
    %v1522 = vadd.f32 0.0, %v1521
    %1523 = vmatprep.mubr.bf16.mxu0 0
    %1524 = vmatmul.mubr.bf16.gmra.mrb[0].mxu0 %v1244
    %v1525 = vpop.f32.mrb[0].mxu0
    %v1526 = vadd.f32 0.0, %v1525
    %v1527 = vpop.f32.mrb[0].mxu0
    %v1528 = vadd.f32 0.0, %v1527
    %v1529 = vpop.f32.mrb[0].mxu0
    %v1530 = vadd.f32 0.0, %v1529
    %v1531 = vpop.f32.mrb[0].mxu0
    %v1532 = vadd.f32 0.0, %v1531
    %1533 = vdwg.mxu0
    %v1534 = vxor.u32 %v1376, 2147483648
    %v1535 = vxor.u32 %v1378, 2147483648
    %v1536 = vxor.u32 %v1380, 2147483648
    %v1537 = vxor.u32 %v1382, 2147483648
    %v1538 = vxor.u32 %v1386, 2147483648
    %v1539 = vxor.u32 %v1388, 2147483648
    %v1540 = vxor.u32 %v1390, 2147483648
    %v1541 = vxor.u32 %v1392, 2147483648
    %v1542 = vxor.u32 %v1396, 2147483648
    %v1543 = vxor.u32 %v1398, 2147483648
    %v1544 = vxor.u32 %v1400, 2147483648
    %v1545 = vxor.u32 %v1402, 2147483648
    %v1546 = vxor.u32 %v1406, 2147483648
    %v1547 = vxor.u32 %v1408, 2147483648
    %v1548 = vxor.u32 %v1410, 2147483648
    %v1549 = vxor.u32 %v1412, 2147483648
    %v1550 = vxor.u32 %v1416, 2147483648
    %v1551 = vxor.u32 %v1418, 2147483648
    %v1552 = vxor.u32 %v1420, 2147483648
    %v1553 = vxor.u32 %v1422, 2147483648
    %v1554 = vxor.u32 %v1426, 2147483648
    %v1555 = vxor.u32 %v1428, 2147483648
    %v1556 = vxor.u32 %v1430, 2147483648
    %v1557 = vxor.u32 %v1432, 2147483648
    %v1558 = vxor.u32 %v1436, 2147483648
    %v1559 = vxor.u32 %v1438, 2147483648
    %v1560 = vxor.u32 %v1440, 2147483648
    %v1561 = vxor.u32 %v1442, 2147483648
    %v1562 = vxor.u32 %v1446, 2147483648
    %v1563 = vxor.u32 %v1448, 2147483648
    %v1564 = vxor.u32 %v1450, 2147483648
    %v1565 = vxor.u32 %v1452, 2147483648
    %v1566 = vxor.u32 %v1456, 2147483648
    %v1567 = vxor.u32 %v1458, 2147483648
    %v1568 = vxor.u32 %v1460, 2147483648
    %v1569 = vxor.u32 %v1462, 2147483648
    %v1570 = vxor.u32 %v1466, 2147483648
    %v1571 = vxor.u32 %v1468, 2147483648
    %v1572 = vxor.u32 %v1470, 2147483648
    %v1573 = vxor.u32 %v1472, 2147483648
    %v1574 = vxor.u32 %v1476, 2147483648
    %v1575 = vxor.u32 %v1478, 2147483648
    %v1576 = vxor.u32 %v1480, 2147483648
    %v1577 = vxor.u32 %v1482, 2147483648
    %v1578 = vxor.u32 %v1486, 2147483648
    %v1579 = vxor.u32 %v1488, 2147483648
    %v1580 = vxor.u32 %v1490, 2147483648
    %v1581 = vxor.u32 %v1492, 2147483648
    %v1582 = vxor.u32 %v1496, 2147483648
    %v1583 = vxor.u32 %v1498, 2147483648
    %v1584 = vxor.u32 %v1500, 2147483648
    %v1585 = vxor.u32 %v1502, 2147483648
    %v1586 = vxor.u32 %v1506, 2147483648
    %v1587 = vxor.u32 %v1508, 2147483648
    %v1588 = vxor.u32 %v1510, 2147483648
    %v1589 = vxor.u32 %v1512, 2147483648
    %v1590 = vxor.u32 %v1516, 2147483648
    %v1591 = vxor.u32 %v1518, 2147483648
    %v1592 = vxor.u32 %v1520, 2147483648
    %v1593 = vxor.u32 %v1522, 2147483648
    %v1594 = vxor.u32 %v1526, 2147483648
    %v1595 = vxor.u32 %v1528, 2147483648
    %v1596 = vxor.u32 %v1530, 2147483648
    %v1597 = vxor.u32 %v1532, 2147483648
    %v1598 = vmul.f32 %v1534, 1.442695
    %v1599 = vpow.pop %v1598
    %v1600 = vmul.f32 %v1535, 1.442695
    %v1601 = vpow.pop %v1600
    %v1602 = vmul.f32 %v1536, 1.442695
    %v1603 = vpow.pop %v1602
    %v1604 = vmul.f32 %v1537, 1.442695
    %v1605 = vpow.pop %v1604
    %v1606 = vmul.f32 %v1538, 1.442695
    %v1607 = vpow.pop %v1606
    %v1608 = vmul.f32 %v1539, 1.442695
    %v1609 = vpow.pop %v1608
    %v1610 = vmul.f32 %v1540, 1.442695
    %v1611 = vpow.pop %v1610
    %v1612 = vmul.f32 %v1541, 1.442695
    %v1613 = vpow.pop %v1612
    %v1614 = vmul.f32 %v1542, 1.442695
    %v1615 = vpow.pop %v1614
    %v1616 = vmul.f32 %v1543, 1.442695
    %v1617 = vpow.pop %v1616
    %v1618 = vmul.f32 %v1544, 1.442695
    %v1619 = vpow.pop %v1618
    %v1620 = vmul.f32 %v1545, 1.442695
    %v1621 = vpow.pop %v1620
    %v1622 = vmul.f32 %v1546, 1.442695
    %v1623 = vpow.pop %v1622
    %v1624 = vmul.f32 %v1547, 1.442695
    %v1625 = vpow.pop %v1624
    %v1626 = vmul.f32 %v1548, 1.442695
    %v1627 = vpow.pop %v1626
    %v1628 = vmul.f32 %v1549, 1.442695
    %v1629 = vpow.pop %v1628
    %v1630 = vmul.f32 %v1550, 1.442695
    %v1631 = vpow.pop %v1630
    %v1632 = vmul.f32 %v1551, 1.442695
    %v1633 = vpow.pop %v1632
    %v1634 = vmul.f32 %v1552, 1.442695
    %v1635 = vpow.pop %v1634
    %v1636 = vmul.f32 %v1553, 1.442695
    %v1637 = vpow.pop %v1636
    %v1638 = vmul.f32 %v1554, 1.442695
    %v1639 = vpow.pop %v1638
    %v1640 = vmul.f32 %v1555, 1.442695
    %v1641 = vpow.pop %v1640
    %v1642 = vmul.f32 %v1556, 1.442695
    %v1643 = vpow.pop %v1642
    %v1644 = vmul.f32 %v1557, 1.442695
    %v1645 = vpow.pop %v1644
    %v1646 = vmul.f32 %v1558, 1.442695
    %v1647 = vpow.pop %v1646
    %v1648 = vmul.f32 %v1559, 1.442695
    %v1649 = vpow.pop %v1648
    %v1650 = vmul.f32 %v1560, 1.442695
    %v1651 = vpow.pop %v1650
    %v1652 = vmul.f32 %v1561, 1.442695
    %v1653 = vpow.pop %v1652
    %v1654 = vmul.f32 %v1562, 1.442695
    %v1655 = vpow.pop %v1654
    %v1656 = vmul.f32 %v1563, 1.442695
    %v1657 = vpow.pop %v1656
    %v1658 = vmul.f32 %v1564, 1.442695
    %v1659 = vpow.pop %v1658
    %v1660 = vmul.f32 %v1565, 1.442695
    %v1661 = vpow.pop %v1660
    %v1662 = vmul.f32 %v1566, 1.442695
    %v1663 = vpow.pop %v1662
    %v1664 = vmul.f32 %v1567, 1.442695
    %v1665 = vpow.pop %v1664
    %v1666 = vmul.f32 %v1568, 1.442695
    %v1667 = vpow.pop %v1666
    %v1668 = vmul.f32 %v1569, 1.442695
    %v1669 = vpow.pop %v1668
    %v1670 = vmul.f32 %v1570, 1.442695
    %v1671 = vpow.pop %v1670
    %v1672 = vmul.f32 %v1571, 1.442695
    %v1673 = vpow.pop %v1672
    %v1674 = vmul.f32 %v1572, 1.442695
    %v1675 = vpow.pop %v1674
    %v1676 = vmul.f32 %v1573, 1.442695
    %v1677 = vpow.pop %v1676
    %v1678 = vmul.f32 %v1574, 1.442695
    %v1679 = vpow.pop %v1678
    %v1680 = vmul.f32 %v1575, 1.442695
    %v1681 = vpow.pop %v1680
    %v1682 = vmul.f32 %v1576, 1.442695
    %v1683 = vpow.pop %v1682
    %v1684 = vmul.f32 %v1577, 1.442695
    %v1685 = vpow.pop %v1684
    %v1686 = vmul.f32 %v1578, 1.442695
    %v1687 = vpow.pop %v1686
    %v1688 = vmul.f32 %v1579, 1.442695
    %v1689 = vpow.pop %v1688
    %v1690 = vmul.f32 %v1580, 1.442695
    %v1691 = vpow.pop %v1690
    %v1692 = vmul.f32 %v1581, 1.442695
    %v1693 = vpow.pop %v1692
    %v1694 = vmul.f32 %v1582, 1.442695
    %v1695 = vpow.pop %v1694
    %v1696 = vmul.f32 %v1583, 1.442695
    %v1697 = vpow.pop %v1696
    %v1698 = vmul.f32 %v1584, 1.442695
    %v1699 = vpow.pop %v1698
    %v1700 = vmul.f32 %v1585, 1.442695
    %v1701 = vpow.pop %v1700
    %v1702 = vmul.f32 %v1586, 1.442695
    %v1703 = vpow.pop %v1702
    %v1704 = vmul.f32 %v1587, 1.442695
    %v1705 = vpow.pop %v1704
    %v1706 = vmul.f32 %v1588, 1.442695
    %v1707 = vpow.pop %v1706
    %v1708 = vmul.f32 %v1589, 1.442695
    %v1709 = vpow.pop %v1708
    %v1710 = vmul.f32 %v1590, 1.442695
    %v1711 = vpow.pop %v1710
    %v1712 = vmul.f32 %v1591, 1.442695
    %v1713 = vpow.pop %v1712
    %v1714 = vmul.f32 %v1592, 1.442695
    %v1715 = vpow.pop %v1714
    %v1716 = vmul.f32 %v1593, 1.442695
    %v1717 = vpow.pop %v1716
    %v1718 = vmul.f32 %v1594, 1.442695
    %v1719 = vpow.pop %v1718
    %v1720 = vmul.f32 %v1595, 1.442695
    %v1721 = vpow.pop %v1720
    %v1722 = vmul.f32 %v1596, 1.442695
    %v1723 = vpow.pop %v1722
    %v1724 = vmul.f32 %v1597, 1.442695
    %v1725 = vpow.pop %v1724
    %v1726 = vadd.f32 %v1599, 1.0
    %v1727 = vadd.f32 %v1601, 1.0
    %v1728 = vadd.f32 %v1603, 1.0
    %v1729 = vadd.f32 %v1605, 1.0
    %v1730 = vadd.f32 %v1607, 1.0
    %v1731 = vadd.f32 %v1609, 1.0
    %v1732 = vadd.f32 %v1611, 1.0
    %v1733 = vadd.f32 %v1613, 1.0
    %v1734 = vadd.f32 %v1615, 1.0
    %v1735 = vadd.f32 %v1617, 1.0
    %v1736 = vadd.f32 %v1619, 1.0
    %v1737 = vadd.f32 %v1621, 1.0
    %v1738 = vadd.f32 %v1623, 1.0
    %v1739 = vadd.f32 %v1625, 1.0
    %v1740 = vadd.f32 %v1627, 1.0
    %v1741 = vadd.f32 %v1629, 1.0
    %v1742 = vadd.f32 %v1631, 1.0
    %v1743 = vadd.f32 %v1633, 1.0
    %v1744 = vadd.f32 %v1635, 1.0
    %v1745 = vadd.f32 %v1637, 1.0
    %v1746 = vadd.f32 %v1639, 1.0
    %v1747 = vadd.f32 %v1641, 1.0
    %v1748 = vadd.f32 %v1643, 1.0
    %v1749 = vadd.f32 %v1645, 1.0
    %v1750 = vadd.f32 %v1647, 1.0
    %v1751 = vadd.f32 %v1649, 1.0
    %v1752 = vadd.f32 %v1651, 1.0
    %v1753 = vadd.f32 %v1653, 1.0
    %v1754 = vadd.f32 %v1655, 1.0
    %v1755 = vadd.f32 %v1657, 1.0
    %v1756 = vadd.f32 %v1659, 1.0
    %v1757 = vadd.f32 %v1661, 1.0
    %v1758 = vadd.f32 %v1663, 1.0
    %v1759 = vadd.f32 %v1665, 1.0
    %v1760 = vadd.f32 %v1667, 1.0
    %v1761 = vadd.f32 %v1669, 1.0
    %v1762 = vadd.f32 %v1671, 1.0
    %v1763 = vadd.f32 %v1673, 1.0
    %v1764 = vadd.f32 %v1675, 1.0
    %v1765 = vadd.f32 %v1677, 1.0
    %v1766 = vadd.f32 %v1679, 1.0
    %v1767 = vadd.f32 %v1681, 1.0
    %v1768 = vadd.f32 %v1683, 1.0
    %v1769 = vadd.f32 %v1685, 1.0
    %v1770 = vadd.f32 %v1687, 1.0
    %v1771 = vadd.f32 %v1689, 1.0
    %v1772 = vadd.f32 %v1691, 1.0
    %v1773 = vadd.f32 %v1693, 1.0
    %v1774 = vadd.f32 %v1695, 1.0
    %v1775 = vadd.f32 %v1697, 1.0
    %v1776 = vadd.f32 %v1699, 1.0
    %v1777 = vadd.f32 %v1701, 1.0
    %v1778 = vadd.f32 %v1703, 1.0
    %v1779 = vadd.f32 %v1705, 1.0
    %v1780 = vadd.f32 %v1707, 1.0
    %v1781 = vadd.f32 %v1709, 1.0
    %v1782 = vadd.f32 %v1711, 1.0
    %v1783 = vadd.f32 %v1713, 1.0
    %v1784 = vadd.f32 %v1715, 1.0
    %v1785 = vadd.f32 %v1717, 1.0
    %v1786 = vadd.f32 %v1719, 1.0
    %v1787 = vadd.f32 %v1721, 1.0
    %v1788 = vadd.f32 %v1723, 1.0
    %v1789 = vadd.f32 %v1725, 1.0
    %v1790 = vrcp.pop %v1726
    %v1791 = vmul.f32 1.0, %v1790
    %v1792 = vrcp.pop %v1727
    %v1793 = vmul.f32 1.0, %v1792
    %v1794 = vrcp.pop %v1728
    %v1795 = vmul.f32 1.0, %v1794
    %v1796 = vrcp.pop %v1729
    %v1797 = vmul.f32 1.0, %v1796
    %v1798 = vrcp.pop %v1730
    %v1799 = vmul.f32 1.0, %v1798
    %v1800 = vrcp.pop %v1731
    %v1801 = vmul.f32 1.0, %v1800
    %v1802 = vrcp.pop %v1732
    %v1803 = vmul.f32 1.0, %v1802
    %v1804 = vrcp.pop %v1733
    %v1805 = vmul.f32 1.0, %v1804
    %v1806 = vrcp.pop %v1734
    %v1807 = vmul.f32 1.0, %v1806
    %v1808 = vrcp.pop %v1735
    %v1809 = vmul.f32 1.0, %v1808
    %v1810 = vrcp.pop %v1736
    %v1811 = vmul.f32 1.0, %v1810
    %v1812 = vrcp.pop %v1737
    %v1813 = vmul.f32 1.0, %v1812
    %v1814 = vrcp.pop %v1738
    %v1815 = vmul.f32 1.0, %v1814
    %v1816 = vrcp.pop %v1739
    %v1817 = vmul.f32 1.0, %v1816
    %v1818 = vrcp.pop %v1740
    %v1819 = vmul.f32 1.0, %v1818
    %v1820 = vrcp.pop %v1741
    %v1821 = vmul.f32 1.0, %v1820
    %v1822 = vrcp.pop %v1742
    %v1823 = vmul.f32 1.0, %v1822
    %v1824 = vrcp.pop %v1743
    %v1825 = vmul.f32 1.0, %v1824
    %v1826 = vrcp.pop %v1744
    %v1827 = vmul.f32 1.0, %v1826
    %v1828 = vrcp.pop %v1745
    %v1829 = vmul.f32 1.0, %v1828
    %v1830 = vrcp.pop %v1746
    %v1831 = vmul.f32 1.0, %v1830
    %v1832 = vrcp.pop %v1747
    %v1833 = vmul.f32 1.0, %v1832
    %v1834 = vrcp.pop %v1748
    %v1835 = vmul.f32 1.0, %v1834
    %v1836 = vrcp.pop %v1749
    %v1837 = vmul.f32 1.0, %v1836
    %v1838 = vrcp.pop %v1750
    %v1839 = vmul.f32 1.0, %v1838
    %v1840 = vrcp.pop %v1751
    %v1841 = vmul.f32 1.0, %v1840
    %v1842 = vrcp.pop %v1752
    %v1843 = vmul.f32 1.0, %v1842
    %v1844 = vrcp.pop %v1753
    %v1845 = vmul.f32 1.0, %v1844
    %v1846 = vrcp.pop %v1754
    %v1847 = vmul.f32 1.0, %v1846
    %v1848 = vrcp.pop %v1755
    %v1849 = vmul.f32 1.0, %v1848
    %v1850 = vrcp.pop %v1756
    %v1851 = vmul.f32 1.0, %v1850
    %v1852 = vrcp.pop %v1757
    %v1853 = vmul.f32 1.0, %v1852
    %v1854 = vrcp.pop %v1758
    %v1855 = vmul.f32 1.0, %v1854
    %v1856 = vrcp.pop %v1759
    %v1857 = vmul.f32 1.0, %v1856
    %v1858 = vrcp.pop %v1760
    %v1859 = vmul.f32 1.0, %v1858
    %v1860 = vrcp.pop %v1761
    %v1861 = vmul.f32 1.0, %v1860
    %v1862 = vrcp.pop %v1762
    %v1863 = vmul.f32 1.0, %v1862
    %v1864 = vrcp.pop %v1763
    %v1865 = vmul.f32 1.0, %v1864
    %v1866 = vrcp.pop %v1764
    %v1867 = vmul.f32 1.0, %v1866
    %v1868 = vrcp.pop %v1765
    %v1869 = vmul.f32 1.0, %v1868
    %v1870 = vrcp.pop %v1766
    %v1871 = vmul.f32 1.0, %v1870
    %v1872 = vrcp.pop %v1767
    %v1873 = vmul.f32 1.0, %v1872
    %v1874 = vrcp.pop %v1768
    %v1875 = vmul.f32 1.0, %v1874
    %v1876 = vrcp.pop %v1769
    %v1877 = vmul.f32 1.0, %v1876
    %v1878 = vrcp.pop %v1770
    %v1879 = vmul.f32 1.0, %v1878
    %v1880 = vrcp.pop %v1771
    %v1881 = vmul.f32 1.0, %v1880
    %v1882 = vrcp.pop %v1772
    %v1883 = vmul.f32 1.0, %v1882
    %v1884 = vrcp.pop %v1773
    %v1885 = vmul.f32 1.0, %v1884
    %v1886 = vrcp.pop %v1774
    %v1887 = vmul.f32 1.0, %v1886
    %v1888 = vrcp.pop %v1775
    %v1889 = vmul.f32 1.0, %v1888
    %v1890 = vrcp.pop %v1776
    %v1891 = vmul.f32 1.0, %v1890
    %v1892 = vrcp.pop %v1777
    %v1893 = vmul.f32 1.0, %v1892
    %v1894 = vrcp.pop %v1778
    %v1895 = vmul.f32 1.0, %v1894
    %v1896 = vrcp.pop %v1779
    %v1897 = vmul.f32 1.0, %v1896
    %v1898 = vrcp.pop %v1780
    %v1899 = vmul.f32 1.0, %v1898
    %v1900 = vrcp.pop %v1781
    %v1901 = vmul.f32 1.0, %v1900
    %v1902 = vrcp.pop %v1782
    %v1903 = vmul.f32 1.0, %v1902
    %v1904 = vrcp.pop %v1783
    %v1905 = vmul.f32 1.0, %v1904
    %v1906 = vrcp.pop %v1784
    %v1907 = vmul.f32 1.0, %v1906
    %v1908 = vrcp.pop %v1785
    %v1909 = vmul.f32 1.0, %v1908
    %v1910 = vrcp.pop %v1786
    %v1911 = vmul.f32 1.0, %v1910
    %v1912 = vrcp.pop %v1787
    %v1913 = vmul.f32 1.0, %v1912
    %v1914 = vrcp.pop %v1788
    %v1915 = vmul.f32 1.0, %v1914
    %v1916 = vrcp.pop %v1789
    %v1917 = vmul.f32 1.0, %v1916
    %v1918 = vmul.f32 %v1376, %v1791
    %v1919 = vmul.f32 %v1378, %v1793
    %v1920 = vmul.f32 %v1380, %v1795
    %v1921 = vmul.f32 %v1382, %v1797
    %v1922 = vmul.f32 %v1386, %v1799
    %v1923 = vmul.f32 %v1388, %v1801
    %v1924 = vmul.f32 %v1390, %v1803
    %v1925 = vmul.f32 %v1392, %v1805
    %v1926 = vmul.f32 %v1396, %v1807
    %v1927 = vmul.f32 %v1398, %v1809
    %v1928 = vmul.f32 %v1400, %v1811
    %v1929 = vmul.f32 %v1402, %v1813
    %v1930 = vmul.f32 %v1406, %v1815
    %v1931 = vmul.f32 %v1408, %v1817
    %v1932 = vmul.f32 %v1410, %v1819
    %v1933 = vmul.f32 %v1412, %v1821
    %v1934 = vmul.f32 %v1416, %v1823
    %v1935 = vmul.f32 %v1418, %v1825
    %v1936 = vmul.f32 %v1420, %v1827
    %v1937 = vmul.f32 %v1422, %v1829
    %v1938 = vmul.f32 %v1426, %v1831
    %v1939 = vmul.f32 %v1428, %v1833
    %v1940 = vmul.f32 %v1430, %v1835
    %v1941 = vmul.f32 %v1432, %v1837
    %v1942 = vmul.f32 %v1436, %v1839
    %v1943 = vmul.f32 %v1438, %v1841
    %v1944 = vmul.f32 %v1440, %v1843
    %v1945 = vmul.f32 %v1442, %v1845
    %v1946 = vmul.f32 %v1446, %v1847
    %v1947 = vmul.f32 %v1448, %v1849
    %v1948 = vmul.f32 %v1450, %v1851
    %v1949 = vmul.f32 %v1452, %v1853
    %v1950 = vmul.f32 %v1456, %v1855
    %v1951 = vmul.f32 %v1458, %v1857
    %v1952 = vmul.f32 %v1460, %v1859
    %v1953 = vmul.f32 %v1462, %v1861
    %v1954 = vmul.f32 %v1466, %v1863
    %v1955 = vmul.f32 %v1468, %v1865
    %v1956 = vmul.f32 %v1470, %v1867
    %v1957 = vmul.f32 %v1472, %v1869
    %v1958 = vmul.f32 %v1476, %v1871
    %v1959 = vmul.f32 %v1478, %v1873
    %v1960 = vmul.f32 %v1480, %v1875
    %v1961 = vmul.f32 %v1482, %v1877
    %v1962 = vmul.f32 %v1486, %v1879
    %v1963 = vmul.f32 %v1488, %v1881
    %v1964 = vmul.f32 %v1490, %v1883
    %v1965 = vmul.f32 %v1492, %v1885
    %v1966 = vmul.f32 %v1496, %v1887
    %v1967 = vmul.f32 %v1498, %v1889
    %v1968 = vmul.f32 %v1500, %v1891
    %v1969 = vmul.f32 %v1502, %v1893
    %v1970 = vmul.f32 %v1506, %v1895
    %v1971 = vmul.f32 %v1508, %v1897
    %v1972 = vmul.f32 %v1510, %v1899
    %v1973 = vmul.f32 %v1512, %v1901
    %v1974 = vmul.f32 %v1516, %v1903
    %v1975 = vmul.f32 %v1518, %v1905
    %v1976 = vmul.f32 %v1520, %v1907
    %v1977 = vmul.f32 %v1522, %v1909
    %v1978 = vmul.f32 %v1526, %v1911
    %v1979 = vmul.f32 %v1528, %v1913
    %v1980 = vmul.f32 %v1530, %v1915
    %v1981 = vmul.f32 %v1532, %v1917
    %v1982 = vpack.c.bf16 %v1920, %v1918
    %v1983 = vpack.c.bf16 %v1921, %v1919
    %v1984 = vpack.c.bf16 %v1924, %v1922
    %v1985 = vpack.c.bf16 %v1925, %v1923
    %v1986 = vpack.c.bf16 %v1928, %v1926
    %v1987 = vpack.c.bf16 %v1929, %v1927
    %v1988 = vpack.c.bf16 %v1932, %v1930
    %v1989 = vpack.c.bf16 %v1933, %v1931
    %v1990 = vpack.c.bf16 %v1936, %v1934
    %v1991 = vpack.c.bf16 %v1937, %v1935
    %v1992 = vpack.c.bf16 %v1940, %v1938
    %v1993 = vpack.c.bf16 %v1941, %v1939
    %v1994 = vpack.c.bf16 %v1944, %v1942
    %v1995 = vpack.c.bf16 %v1945, %v1943
    %v1996 = vpack.c.bf16 %v1948, %v1946
    %v1997 = vpack.c.bf16 %v1949, %v1947
    %v1998 = vpack.c.bf16 %v1952, %v1950
    %v1999 = vpack.c.bf16 %v1953, %v1951
    %v2000 = vpack.c.bf16 %v1956, %v1954
    %v2001 = vpack.c.bf16 %v1957, %v1955
    %v2002 = vpack.c.bf16 %v1960, %v1958
    %v2003 = vpack.c.bf16 %v1961, %v1959
    %v2004 = vpack.c.bf16 %v1964, %v1962
    %v2005 = vpack.c.bf16 %v1965, %v1963
    %v2006 = vpack.c.bf16 %v1968, %v1966
    %v2007 = vpack.c.bf16 %v1969, %v1967
    %v2008 = vpack.c.bf16 %v1972, %v1970
    %v2009 = vpack.c.bf16 %v1973, %v1971
    %v2010 = vpack.c.bf16 %v1976, %v1974
    %v2011 = vpack.c.bf16 %v1977, %v1975
    %v2012 = vpack.c.bf16 %v1980, %v1978
    %v2013 = vpack.c.bf16 %v1981, %v1979
    %v2014 = vld [vmem:[#allocation10] sm:$0xf]
    %v2015 = vld [vmem:[#allocation10 + $0x4] sm:$0xf]
    %v2016 = vld [vmem:[#allocation10 + $0x8] sm:$0xf]
    %v2017 = vld [vmem:[#allocation10 + $0xc] sm:$0xf]
    %v2018 = vld [vmem:[#allocation10 + $0x10] sm:$0xf]
    %v2019 = vld [vmem:[#allocation10 + $0x14] sm:$0xf]
    %v2020 = vld [vmem:[#allocation10 + $0x18] sm:$0xf]
    %v2021 = vld [vmem:[#allocation10 + $0x1c] sm:$0xf]
    %v2022 = vld [vmem:[#allocation10 + $0x20] sm:$0xf]
    %v2023 = vld [vmem:[#allocation10 + $0x24] sm:$0xf]
    %v2024 = vld [vmem:[#allocation10 + $0x28] sm:$0xf]
    %v2025 = vld [vmem:[#allocation10 + $0x2c] sm:$0xf]
    %v2026 = vld [vmem:[#allocation10 + $0x30] sm:$0xf]
    %v2027 = vld [vmem:[#allocation10 + $0x34] sm:$0xf]
    %v2028 = vld [vmem:[#allocation10 + $0x38] sm:$0xf]
    %v2029 = vld [vmem:[#allocation10 + $0x3c] sm:$0xf]
    %v2030 = vld [vmem:[#allocation10 + $0x40] sm:$0xf]
    %v2031 = vld [vmem:[#allocation10 + $0x44] sm:$0xf]
    %v2032 = vld [vmem:[#allocation10 + $0x48] sm:$0xf]
    %v2033 = vld [vmem:[#allocation10 + $0x4c] sm:$0xf]
    %v2034 = vld [vmem:[#allocation10 + $0x50] sm:$0xf]
    %v2035 = vld [vmem:[#allocation10 + $0x54] sm:$0xf]
    %v2036 = vld [vmem:[#allocation10 + $0x58] sm:$0xf]
    %v2037 = vld [vmem:[#allocation10 + $0x5c] sm:$0xf]
    %v2038 = vld [vmem:[#allocation10 + $0x60] sm:$0xf]
    %v2039 = vld [vmem:[#allocation10 + $0x64] sm:$0xf]
    %v2040 = vld [vmem:[#allocation10 + $0x68] sm:$0xf]
    %v2041 = vld [vmem:[#allocation10 + $0x6c] sm:$0xf]
    %v2042 = vld [vmem:[#allocation10 + $0x70] sm:$0xf]
    %v2043 = vld [vmem:[#allocation10 + $0x74] sm:$0xf]
    %v2044 = vld [vmem:[#allocation10 + $0x78] sm:$0xf]
    %v2045 = vld [vmem:[#allocation10 + $0x7c] sm:$0xf]
    %v2078 = vunpack.c.l.b16 %v2014
    %v2079 = vunpack.c.l.b16 %v2015
    %v2080 = vunpack.c.l.b16 %v2016
    %v2081 = vunpack.c.l.b16 %v2017
    %v2082 = vunpack.c.l.b16 %v2018
    %v2083 = vunpack.c.l.b16 %v2019
    %v2084 = vunpack.c.l.b16 %v2020
    %v2085 = vunpack.c.l.b16 %v2021
    %v2086 = vunpack.c.l.b16 %v2022
    %v2087 = vunpack.c.l.b16 %v2023
    %v2088 = vunpack.c.l.b16 %v2024
    %v2089 = vunpack.c.l.b16 %v2025
    %v2090 = vunpack.c.l.b16 %v2026
    %v2091 = vunpack.c.l.b16 %v2027
    %v2092 = vunpack.c.l.b16 %v2028
    %v2093 = vunpack.c.l.b16 %v2029
    %v2094 = vunpack.c.l.b16 %v2030
    %v2095 = vunpack.c.l.b16 %v2031
    %v2096 = vunpack.c.l.b16 %v2032
    %v2097 = vunpack.c.l.b16 %v2033
    %v2098 = vunpack.c.l.b16 %v2034
    %v2099 = vunpack.c.l.b16 %v2035
    %v2100 = vunpack.c.l.b16 %v2036
    %v2101 = vunpack.c.l.b16 %v2037
    %v2102 = vunpack.c.l.b16 %v2038
    %v2103 = vunpack.c.l.b16 %v2039
    %v2104 = vunpack.c.l.b16 %v2040
    %v2105 = vunpack.c.l.b16 %v2041
    %v2106 = vunpack.c.l.b16 %v2042
    %v2107 = vunpack.c.l.b16 %v2043
    %v2108 = vunpack.c.l.b16 %v2044
    %v2109 = vunpack.c.l.b16 %v2045
    %v2110 = vpack.c.b16 %v2079, %v2078
    %v2111 = vpack.c.b16 %v2081, %v2080
    %v2112 = vpack.c.b16 %v2083, %v2082
    %v2113 = vpack.c.b16 %v2085, %v2084
    %v2114 = vpack.c.b16 %v2087, %v2086
    %v2115 = vpack.c.b16 %v2089, %v2088
    %v2116 = vpack.c.b16 %v2091, %v2090
    %v2117 = vpack.c.b16 %v2093, %v2092
    %v2118 = vpack.c.b16 %v2095, %v2094
    %v2119 = vpack.c.b16 %v2097, %v2096
    %v2120 = vpack.c.b16 %v2099, %v2098
    %v2121 = vpack.c.b16 %v2101, %v2100
    %v2122 = vpack.c.b16 %v2103, %v2102
    %v2123 = vpack.c.b16 %v2105, %v2104
    %v2124 = vpack.c.b16 %v2107, %v2106
    %v2125 = vpack.c.b16 %v2109, %v2108
    %2142 = vmatprep.subr.bf16.mxu0 0
    %2143 = vmatpush1.bf16.msra.mxu0 %v2110
    %2144 = vmatprep.subr.bf16.mxu0 0
    %2145 = vmatpush1.bf16.msra.mxu0 %v2111
    %2146 = vmatprep.subr.bf16.mxu0 0
    %2147 = vmatpush1.bf16.msra.mxu0 %v2112
    %2148 = vmatprep.subr.bf16.mxu0 0
    %2149 = vmatpush1.bf16.msra.mxu0 %v2113
    %2150 = vmatprep.subr.bf16.mxu0 0
    %2151 = vmatpush1.bf16.msra.mxu0 %v2114
    %2152 = vmatprep.subr.bf16.mxu0 0
    %2153 = vmatpush1.bf16.msra.mxu0 %v2115
    %2154 = vmatprep.subr.bf16.mxu0 0
    %2155 = vmatpush1.bf16.msra.mxu0 %v2116
    %2156 = vmatprep.subr.bf16.mxu0 0
    %2157 = vmatpush1.bf16.msra.mxu0 %v2117
    %2158 = vmatprep.subr.bf16.mxu0 0
    %2159 = vmatpush1.bf16.msra.mxu0 %v2118
    %2160 = vmatprep.subr.bf16.mxu0 0
    %2161 = vmatpush1.bf16.msra.mxu0 %v2119
    %2162 = vmatprep.subr.bf16.mxu0 0
    %2163 = vmatpush1.bf16.msra.mxu0 %v2120
    %2164 = vmatprep.subr.bf16.mxu0 0
    %2165 = vmatpush1.bf16.msra.mxu0 %v2121
    %2166 = vmatprep.subr.bf16.mxu0 0
    %2167 = vmatpush1.bf16.msra.mxu0 %v2122
    %2168 = vmatprep.subr.bf16.mxu0 0
    %2169 = vmatpush1.bf16.msra.mxu0 %v2123
    %2170 = vmatprep.subr.bf16.mxu0 0
    %2171 = vmatpush1.bf16.msra.mxu0 %v2124
    %2172 = vmatprep.subr.bf16.mxu0 0
    %2173 = vmatpush1.bf16.msra.mxu0 %v2125
    %2174 = vmatprep.mubr.bf16.mxu0 %v1983
    %2175 = vmatmul.mubr.bf16.gmra.mrb[0].mxu0 %v1982
    %v2176 = vpop.f32.mrb[0].mxu0
    %v2177 = vadd.f32 0.0, %v2176
    %v2178 = vpop.f32.mrb[0].mxu0
    %v2179 = vpop.f32.mrb[0].mxu0
    %v2180 = vadd.f32 0.0, %v2179
    %v2181 = vpop.f32.mrb[0].mxu0
    %2182 = vmatprep.mubr.bf16.mxu0 %v1985
    %2183 = vmatmul.mubr.bf16.gmra.mrb[0].mxu0 %v1984
    %v2184 = vpop.f32.mrb[0].mxu0
    %v2185 = vadd.f32 0.0, %v2184
    %v2186 = vpop.f32.mrb[0].mxu0
    %v2187 = vpop.f32.mrb[0].mxu0
    %v2188 = vadd.f32 0.0, %v2187
    %v2189 = vpop.f32.mrb[0].mxu0
    %2190 = vmatprep.mubr.bf16.mxu0 %v1987
    %2191 = vmatmul.mubr.bf16.gmra.mrb[0].mxu0 %v1986
    %v2192 = vpop.f32.mrb[0].mxu0
    %v2193 = vadd.f32 0.0, %v2192
    %v2194 = vpop.f32.mrb[0].mxu0
    %v2195 = vpop.f32.mrb[0].mxu0
    %v2196 = vadd.f32 0.0, %v2195
    %v2197 = vpop.f32.mrb[0].mxu0
    %2198 = vmatprep.mubr.bf16.mxu0 %v1989
    %2199 = vmatmul.mubr.bf16.gmra.mrb[0].mxu0 %v1988
    %v2200 = vpop.f32.mrb[0].mxu0
    %v2201 = vadd.f32 0.0, %v2200
    %v2202 = vpop.f32.mrb[0].mxu0
    %v2203 = vpop.f32.mrb[0].mxu0
    %v2204 = vadd.f32 0.0, %v2203
    %v2205 = vpop.f32.mrb[0].mxu0
    %2206 = vmatprep.mubr.bf16.mxu0 %v1991
    %2207 = vmatmul.mubr.bf16.gmra.mrb[0].mxu0 %v1990
    %v2208 = vpop.f32.mrb[0].mxu0
    %v2209 = vadd.f32 0.0, %v2208
    %v2210 = vpop.f32.mrb[0].mxu0
    %v2211 = vpop.f32.mrb[0].mxu0
    %v2212 = vadd.f32 0.0, %v2211
    %v2213 = vpop.f32.mrb[0].mxu0
    %2214 = vmatprep.mubr.bf16.mxu0 %v1993
    %2215 = vmatmul.mubr.bf16.gmra.mrb[0].mxu0 %v1992
    %v2216 = vpop.f32.mrb[0].mxu0
    %v2217 = vadd.f32 0.0, %v2216
    %v2218 = vpop.f32.mrb[0].mxu0
    %v2219 = vpop.f32.mrb[0].mxu0
    %v2220 = vadd.f32 0.0, %v2219
    %v2221 = vpop.f32.mrb[0].mxu0
    %2222 = vmatprep.mubr.bf16.mxu0 %v1995
    %2223 = vmatmul.mubr.bf16.gmra.mrb[0].mxu0 %v1994
    %v2224 = vpop.f32.mrb[0].mxu0
    %v2225 = vadd.f32 0.0, %v2224
    %v2226 = vpop.f32.mrb[0].mxu0
    %v2227 = vpop.f32.mrb[0].mxu0
    %v2228 = vadd.f32 0.0, %v2227
    %v2229 = vpop.f32.mrb[0].mxu0
    %2230 = vmatprep.mubr.bf16.mxu0 %v1997
    %2231 = vmatmul.mubr.bf16.gmra.mrb[0].mxu0 %v1996
    %v2232 = vpop.f32.mrb[0].mxu0
    %v2233 = vadd.f32 0.0, %v2232
    %v2234 = vpop.f32.mrb[0].mxu0
    %v2235 = vpop.f32.mrb[0].mxu0
    %v2236 = vadd.f32 0.0, %v2235
    %v2237 = vpop.f32.mrb[0].mxu0
    %2238 = vmatprep.mubr.bf16.mxu0 %v1999
    %2239 = vmatmul.mubr.bf16.gmra.mrb[0].mxu0 %v1998
    %v2240 = vpop.f32.mrb[0].mxu0
    %v2241 = vadd.f32 0.0, %v2240
    %v2242 = vpop.f32.mrb[0].mxu0
    %v2243 = vpop.f32.mrb[0].mxu0
    %v2244 = vadd.f32 0.0, %v2243
    %v2245 = vpop.f32.mrb[0].mxu0
    %2246 = vmatprep.mubr.bf16.mxu0 %v2001
    %2247 = vmatmul.mubr.bf16.gmra.mrb[0].mxu0 %v2000
    %v2248 = vpop.f32.mrb[0].mxu0
    %v2249 = vadd.f32 0.0, %v2248
    %v2250 = vpop.f32.mrb[0].mxu0
    %v2251 = vpop.f32.mrb[0].mxu0
    %v2252 = vadd.f32 0.0, %v2251
    %v2253 = vpop.f32.mrb[0].mxu0
    %2254 = vmatprep.mubr.bf16.mxu0 %v2003
    %2255 = vmatmul.mubr.bf16.gmra.mrb[0].mxu0 %v2002
    %v2256 = vpop.f32.mrb[0].mxu0
    %v2257 = vadd.f32 0.0, %v2256
    %v2258 = vpop.f32.mrb[0].mxu0
    %v2259 = vpop.f32.mrb[0].mxu0
    %v2260 = vadd.f32 0.0, %v2259
    %v2261 = vpop.f32.mrb[0].mxu0
    %2262 = vmatprep.mubr.bf16.mxu0 %v2005
    %2263 = vmatmul.mubr.bf16.gmra.mrb[0].mxu0 %v2004
    %v2264 = vpop.f32.mrb[0].mxu0
    %v2265 = vadd.f32 0.0, %v2264
    %v2266 = vpop.f32.mrb[0].mxu0
    %v2267 = vpop.f32.mrb[0].mxu0
    %v2268 = vadd.f32 0.0, %v2267
    %v2269 = vpop.f32.mrb[0].mxu0
    %2270 = vmatprep.mubr.bf16.mxu0 %v2007
    %2271 = vmatmul.mubr.bf16.gmra.mrb[0].mxu0 %v2006
    %v2272 = vpop.f32.mrb[0].mxu0
    %v2273 = vadd.f32 0.0, %v2272
    %v2274 = vpop.f32.mrb[0].mxu0
    %v2275 = vpop.f32.mrb[0].mxu0
    %v2276 = vadd.f32 0.0, %v2275
    %v2277 = vpop.f32.mrb[0].mxu0
    %2278 = vmatprep.mubr.bf16.mxu0 %v2009
    %2279 = vmatmul.mubr.bf16.gmra.mrb[0].mxu0 %v2008
    %v2280 = vpop.f32.mrb[0].mxu0
    %v2281 = vadd.f32 0.0, %v2280
    %v2282 = vpop.f32.mrb[0].mxu0
    %v2283 = vpop.f32.mrb[0].mxu0
    %v2284 = vadd.f32 0.0, %v2283
    %v2285 = vpop.f32.mrb[0].mxu0
    %2286 = vmatprep.mubr.bf16.mxu0 %v2011
    %2287 = vmatmul.mubr.bf16.gmra.mrb[0].mxu0 %v2010
    %v2288 = vpop.f32.mrb[0].mxu0
    %v2289 = vadd.f32 0.0, %v2288
    %v2290 = vpop.f32.mrb[0].mxu0
    %v2291 = vpop.f32.mrb[0].mxu0
    %v2292 = vadd.f32 0.0, %v2291
    %v2293 = vpop.f32.mrb[0].mxu0
    %2294 = vmatprep.mubr.bf16.mxu0 %v2013
    %2295 = vmatmul.mubr.bf16.gmra.mrb[0].mxu0 %v2012
    %v2296 = vpop.f32.mrb[0].mxu0
    %v2297 = vadd.f32 0.0, %v2296
    %v2298 = vpop.f32.mrb[0].mxu0
    %v2299 = vpop.f32.mrb[0].mxu0
    %v2300 = vadd.f32 0.0, %v2299
    %v2301 = vpop.f32.mrb[0].mxu0
    %2302 = vdwg.mxu0
    %v2303 = vmul.f32 %v2177, %v783
    %v2304 = vmul.f32 %v2180, %v786
    %v2305 = vmul.f32 %v2185, %v791
    %v2306 = vmul.f32 %v2188, %v794
    %v2307 = vmul.f32 %v2193, %v799
    %v2308 = vmul.f32 %v2196, %v802
    %v2309 = vmul.f32 %v2201, %v807
    %v2310 = vmul.f32 %v2204, %v810
    %v2311 = vmul.f32 %v2209, %v815
    %v2312 = vmul.f32 %v2212, %v818
    %v2313 = vmul.f32 %v2217, %v823
    %v2314 = vmul.f32 %v2220, %v826
    %v2315 = vmul.f32 %v2225, %v831
    %v2316 = vmul.f32 %v2228, %v834
    %v2317 = vmul.f32 %v2233, %v839
    %v2318 = vmul.f32 %v2236, %v842
    %v2319 = vmul.f32 %v2241, %v847
    %v2320 = vmul.f32 %v2244, %v850
    %v2321 = vmul.f32 %v2249, %v855
    %v2322 = vmul.f32 %v2252, %v858
    %v2323 = vmul.f32 %v2257, %v863
    %v2324 = vmul.f32 %v2260, %v866
    %v2325 = vmul.f32 %v2265, %v871
    %v2326 = vmul.f32 %v2268, %v874
    %v2327 = vmul.f32 %v2273, %v879
    %v2328 = vmul.f32 %v2276, %v882
    %v2329 = vmul.f32 %v2281, %v887
    %v2330 = vmul.f32 %v2284, %v890
    %v2331 = vmul.f32 %v2289, %v895
    %v2332 = vmul.f32 %v2292, %v898
    %v2333 = vmul.f32 %v2297, %v903
    %v2334 = vmul.f32 %v2300, %v906
    %v2335 = vadd.f32 %v90, %v2303
    %v2336 = vadd.f32 %v91, %v2304
    %v2337 = vadd.f32 %v92, %v2305
    %v2338 = vadd.f32 %v93, %v2306
    %v2339 = vadd.f32 %v94, %v2307
    %v2340 = vadd.f32 %v95, %v2308
    %v2341 = vadd.f32 %v96, %v2309
    %v2342 = vadd.f32 %v97, %v2310
    %v2343 = vadd.f32 %v98, %v2311
    %v2344 = vadd.f32 %v99, %v2312
    %v2345 = vadd.f32 %v100, %v2313
    %v2346 = vadd.f32 %v101, %v2314
    %v2347 = vadd.f32 %v102, %v2315
    %v2348 = vadd.f32 %v103, %v2316
    %v2349 = vadd.f32 %v104, %v2317
    %v2350 = vadd.f32 %v105, %v2318
    %v2351 = vadd.f32 %v106, %v2319
    %v2352 = vadd.f32 %v107, %v2320
    %v2353 = vadd.f32 %v108, %v2321
    %v2354 = vadd.f32 %v109, %v2322
    %v2355 = vadd.f32 %v110, %v2323
    %v2356 = vadd.f32 %v111, %v2324
    %v2357 = vadd.f32 %v112, %v2325
    %v2358 = vadd.f32 %v113, %v2326
    %v2359 = vadd.f32 %v114, %v2327
    %v2360 = vadd.f32 %v115, %v2328
    %v2361 = vadd.f32 %v116, %v2329
    %v2362 = vadd.f32 %v117, %v2330
    %v2363 = vadd.f32 %v118, %v2331
    %v2364 = vadd.f32 %v119, %v2332
    %v2365 = vadd.f32 %v120, %v2333
    %v2366 = vadd.f32 %v121, %v2334
    %2367 = vst [vmem:[#allocation11] sm:$0xff] %v2335
    %2368 = vst [vmem:[#allocation11 + $0x8] sm:$0xff] %v2336
    %2369 = vst [vmem:[#allocation11 + $0x10] sm:$0xff] %v2337
    %2370 = vst [vmem:[#allocation11 + $0x18] sm:$0xff] %v2338
    %2371 = vst [vmem:[#allocation11 + $0x20] sm:$0xff] %v2339
    %2372 = vst [vmem:[#allocation11 + $0x28] sm:$0xff] %v2340
    %2373 = vst [vmem:[#allocation11 + $0x30] sm:$0xff] %v2341
    %2374 = vst [vmem:[#allocation11 + $0x38] sm:$0xff] %v2342
    %2375 = vst [vmem:[#allocation11 + $0x40] sm:$0xff] %v2343
    %2376 = vst [vmem:[#allocation11 + $0x48] sm:$0xff] %v2344
    %2377 = vst [vmem:[#allocation11 + $0x50] sm:$0xff] %v2345
    %2378 = vst [vmem:[#allocation11 + $0x58] sm:$0xff] %v2346
    %2379 = vst [vmem:[#allocation11 + $0x60] sm:$0xff] %v2347
    %2380 = vst [vmem:[#allocation11 + $0x68] sm:$0xff] %v2348
    %2381 = vst [vmem:[#allocation11 + $0x70] sm:$0xff] %v2349
    %2382 = vst [vmem:[#allocation11 + $0x78] sm:$0xff] %v2350
    %2383 = vst [vmem:[#allocation11 + $0x80] sm:$0xff] %v2351
    %2384 = vst [vmem:[#allocation11 + $0x88] sm:$0xff] %v2352
    %2385 = vst [vmem:[#allocation11 + $0x90] sm:$0xff] %v2353
    %2386 = vst [vmem:[#allocation11 + $0x98] sm:$0xff] %v2354
    %2387 = vst [vmem:[#allocation11 + $0xa0] sm:$0xff] %v2355
    %2388 = vst [vmem:[#allocation11 + $0xa8] sm:$0xff] %v2356
    %2389 = vst [vmem:[#allocation11 + $0xb0] sm:$0xff] %v2357
    %2390 = vst [vmem:[#allocation11 + $0xb8] sm:$0xff] %v2358
    %2391 = vst [vmem:[#allocation11 + $0xc0] sm:$0xff] %v2359
    %2392 = vst [vmem:[#allocation11 + $0xc8] sm:$0xff] %v2360
    %2393 = vst [vmem:[#allocation11 + $0xd0] sm:$0xff] %v2361
    %2394 = vst [vmem:[#allocation11 + $0xd8] sm:$0xff] %v2362
    %2395 = vst [vmem:[#allocation11 + $0xe0] sm:$0xff] %v2363
    %2396 = vst [vmem:[#allocation11 + $0xe8] sm:$0xff] %v2364
    %2397 = vst [vmem:[#allocation11 + $0xf0] sm:$0xff] %v2365
    %2398 = vst [vmem:[#allocation11 + $0xf8] sm:$0xff] %v2366
    // Predicated region
    $region42: #{tpu_custom_call.1} parent=1 // pred_check
      _
    $region43: #{tpu_custom_call.1} parent=1 // pred_check_branch
      %2400 = sbr.rel (0) target = $region45
    $region44: #{tpu_custom_call.1} parent=1 // pred_region
      %s2402 = ssub.s32 4096, 4096
      %2403 = vsyncadd [#allocation4], %s2402
      %s2404 = sshll.u32 [#allocation11], 4
      %s2405 = int_to_ptr.vmem [resolvable:$true] %s2404
      %2410 = dma.vmem_to_hbm [thread:$0]  %s2405, 4096, %s5, [#allocation4], 128, 128, 8
    $region45: #{tpu_custom_call.1} parent=1 // pred_fallthru
      _
    // Predicated region
    $region46: #{tpu_custom_call.1} parent=1 // pred_check
      _
    $region47: #{tpu_custom_call.1} parent=1 // pred_check_branch
      %2412 = sbr.rel (0) target = $region49
    $region48: #{tpu_custom_call.1} parent=1 // pred_region
      %2413 = dma.done [#allocation4], 4096
    $region49: #{tpu_custom_call.1} parent=1 // pred_fallthru
      _
    %2414 = vsyncpa [#allocation3], 1
    %2415 = vsyncpa [#allocation6], 1
    %2416 = vsyncpa [#allocation9], 1
    %2417 = vsyncpa [#allocation4], 1

</llo_original>
